<compile_context>
chip_gen: v5e
topology: v5e:2x2
jax: 0.10.0
libtpu: 0.0.40
codegen_flags: <defaults>
</compile_context>

<pallas_src>
import functools

import numpy as np
import jax
import jax.numpy as jnp
from jax.experimental import pallas as pl
from jax.experimental.pallas import tpu as pltpu

LANE = 128        # head / output-slab width (one full vreg lane group)
HID_PAD = 128     # hidden sizes (32) padded up to one lane group
EXTRA_PAD = 16    # added_fc_input (3) padded to a bf16-sublane-friendly 16

CFG = dict(
    input_width=16, input_height=16, input_channels=4,
    output_size=4,
    kernel_sizes=[3, 3], n_channels=[8, 16], strides=[2, 2], paddings=[1, 1],
    hidden_sizes_aux=[32], hidden_sizes_main=[32],
    added_fc_input_size=3,
    aux_output_size=1,
    init_w=0.05,
)


# ------------------------------ fused kernel ------------------------------- #

def make_fused_kernel(n_conv, n_main, n_aux, out_size, aux_size):
    """Fused ScriptPolicy forward.  Ref order:
       [xc, xe,
        (Wconv_i, bconv_i) * n_conv,                      # dense NCHW Toeplitz
        Wmain0_conv, Wmain0_extra, bmain0,                # first main FC (split)
        (Wmain_i, bmain_i) * (n_main - 1),
        (Waux_i, baux_i) * n_aux,
        Whead_main, Whead_aux, bhead,
        out]"""

    def kernel(*refs):
        *in_refs, out_ref = refs
        it = iter(in_refs)
        nxt = lambda: next(it)

        xc = nxt()[...].astype(jnp.bfloat16)        # (Bp, C*H*W) conv input
        xe = nxt()[...].astype(jnp.bfloat16)        # (Bp, EXTRA_PAD) extra FC in

        # conv stack: each layer is a dense NCHW->NCHW GEMM + bias + ReLU.
        h = xc
        for _ in range(n_conv):
            w = nxt()[...]
            b = nxt()[...]
            y = jnp.dot(h, w, preferred_element_type=jnp.float32) + b
            h = jnp.maximum(y, 0.0).astype(jnp.bfloat16)

        # main FC stack (first layer consumes conv features + extra FC input).
        w_c = nxt()[...]
        w_e = nxt()[...]
        b0 = nxt()[...]
        y = (jnp.dot(h, w_c, preferred_element_type=jnp.float32)
             + jnp.dot(xe, w_e, preferred_element_type=jnp.float32)
             + b0)
        hm = jnp.maximum(y, 0.0).astype(jnp.bfloat16)
        for _ in range(n_main - 1):
            w = nxt()[...]
            b = nxt()[...]
            y = jnp.dot(hm, w, preferred_element_type=jnp.float32) + b
            hm = jnp.maximum(y, 0.0).astype(jnp.bfloat16)

        # aux FC stack (consumes conv features only).
        ha = h
        for _ in range(n_aux):
            w = nxt()[...]
            b = nxt()[...]
            y = jnp.dot(ha, w, preferred_element_type=jnp.float32) + b
            ha = jnp.maximum(y, 0.0).astype(jnp.bfloat16)

        # Fused heads: z columns [0,A)=mean, [A,2A)=log_std, [2A,3A)=mean
        # (duplicated so tanh lands in place), [3A,3A+X)=aux logit.
        w_hm = nxt()[...]
        w_ha = nxt()[...]
        b_h = nxt()[...]
        z = (jnp.dot(hm, w_hm, preferred_element_type=jnp.float32)
             + jnp.dot(ha, w_ha, preferred_element_type=jnp.float32)
             + b_h)

        osz, asz = out_size, aux_size
        col = jax.lax.broadcasted_iota(jnp.int32, z.shape, 1)
        std = jnp.exp(jnp.clip(z, -20.0, 2.0))     # clamp keeps junk lanes finite
        slab = jnp.where(col < osz, z,
               jnp.where(col < 2 * osz, std,
               jnp.where(col < 3 * osz, jnp.tanh(z),
               jnp.where(col < 3 * osz + asz, jax.nn.sigmoid(z),
                         jnp.zeros_like(z)))))
        out_ref[...] = slab                         # single lane-dense store

    return kernel


# -------------------------- parameter init / pack -------------------------- #

def init_params(key, cfg):
    """torch-equivalent init (xavier_uniform conv weights, zero conv bias,
    uniform(+/-init_w) FC weights/biases), kept as numpy in torch layouts."""
    iw = cfg["init_w"]

    def unif(k, shape, lim):
        return np.asarray(jax.random.uniform(k, shape, jnp.float32, -lim, lim))

    raw = {"conv": [], "main": [], "aux": []}
    cin = cfg["input_channels"]
    h, w = cfg["input_height"], cfg["input_width"]
    for cout, ksz, s, p in zip(cfg["n_channels"], cfg["kernel_sizes"],
                               cfg["strides"], cfg["paddings"]):
        key, sub = jax.random.split(key)
        a = float(np.sqrt(6.0 / (cin * ksz * ksz + cout * ksz * ksz)))
        wgt = unif(sub, (cout, cin, ksz, ksz), a)       # torch OIHW layout
        bias = np.zeros((cout,), np.float32)            # conv.bias.fill_(0)
        raw["conv"].append((wgt, bias, s, p))
        cin = cout
        h = (h + 2 * p - ksz) // s + 1
        w = (w + 2 * p - ksz) // s + 1
    raw["conv_flat"] = cin * h * w

    fin = raw["conv_flat"] + cfg["added_fc_input_size"]
    for hs in cfg["hidden_sizes_main"]:
        key, k1, k2 = jax.random.split(key, 3)
        raw["main"].append((unif(k1, (fin, hs), iw), unif(k2, (hs,), iw)))
        fin = hs
    key, k1, k2 = jax.random.split(key, 3)
    raw["last_main"] = (unif(k1, (fin, cfg["output_size"]), iw),
                        unif(k2, (cfg["output_size"],), iw))
    key, k1, k2 = jax.random.split(key, 3)
    raw["last_log_std"] = (unif(k1, (fin, cfg["output_size"]), iw),
                           unif(k2, (cfg["output_size"],), iw))

    fin = raw["conv_flat"]
    for hs in cfg["hidden_sizes_aux"]:
        key, k1, k2 = jax.random.split(key, 3)
        raw["aux"].append((unif(k1, (fin, hs), iw), unif(k2, (hs,), iw)))
        fin = hs
    key, k1, k2 = jax.random.split(key, 3)
    raw["last_aux"] = (unif(k1, (fin, cfg["aux_output_size"]), iw),
                       unif(k2, (cfg["aux_output_size"],), iw))
    return raw


def conv_to_dense(w_oihw, stride, pad, H, W):
    """Exact Toeplitz expansion of a PyTorch Conv2d: dense matrix mapping the
    NCHW-flattened input vector to the NCHW-flattened conv output."""
    Cout, Cin, KH, KW = w_oihw.shape
    OH = (H + 2 * pad - KH) // stride + 1
    OW = (W + 2 * pad - KW) // stride + 1
    D = np.zeros((Cin * H * W, Cout * OH * OW), np.float32)
    co_off = np.arange(Cout) * OH * OW
    for oh in range(OH):
        for ow in range(OW):
            o_idx = oh * OW + ow
            for kh in range(KH):
                ih = oh * stride - pad + kh
                if ih < 0 or ih >= H:
                    continue
                for kw in range(KW):
                    iw = ow * stride - pad + kw
                    if iw < 0 or iw >= W:
                        continue
                    for ci in range(Cin):
                        D[ci * H * W + ih * W + iw, co_off + o_idx] = \
                            w_oihw[:, ci, kh, kw]
    return D, OH, OW


def pack_params(raw, cfg):
    """One-time padding / fusion / bf16 cast into the operands the kernel eats."""
    packed = []
    h, w = cfg["input_height"], cfg["input_width"]
    for wgt, bias, s, p in raw["conv"]:
        D, oh, ow = conv_to_dense(wgt, s, p, h, w)
        b_flat = np.repeat(bias, oh * ow).astype(np.float32)
        packed += [jnp.asarray(D, jnp.bfloat16),
                   jnp.asarray(b_flat.reshape(1, -1), jnp.float32)]
        h, w = oh, ow

    conv_flat = raw["conv_flat"]
    add = cfg["added_fc_input_size"]

    # first main FC layer: split conv-feature rows and extra-input rows, pad.
    w0, b0 = raw["main"][0]
    hs0 = w0.shape[1]
    w_c = np.zeros((conv_flat, HID_PAD), np.float32)
    w_c[:, :hs0] = w0[:conv_flat]
    w_e = np.zeros((EXTRA_PAD, HID_PAD), np.float32)
    if add:
        w_e[:add, :hs0] = w0[conv_flat:conv_flat + add]
    b_p = np.zeros((1, HID_PAD), np.float32)
    b_p[0, :hs0] = b0
    packed += [jnp.asarray(w_c, jnp.bfloat16), jnp.asarray(w_e, jnp.bfloat16),
               jnp.asarray(b_p, jnp.float32)]
    prev = hs0
    for wi, bi in raw["main"][1:]:
        hsi = wi.shape[1]
        wp = np.zeros((HID_PAD, HID_PAD), np.float32)
        wp[:prev, :hsi] = wi
        bp = np.zeros((1, HID_PAD), np.float32)
        bp[0, :hsi] = bi
        packed += [jnp.asarray(wp, jnp.bfloat16), jnp.asarray(bp, jnp.float32)]
        prev = hsi
    main_last = prev

    prev, rows = conv_flat, conv_flat
    for wi, bi in raw["aux"]:
        hsi = wi.shape[1]
        wp = np.zeros((rows, HID_PAD), np.float32)
        wp[:prev, :hsi] = wi
        bp = np.zeros((1, HID_PAD), np.float32)
        bp[0, :hsi] = bi
        packed += [jnp.asarray(wp, jnp.bfloat16), jnp.asarray(bp, jnp.float32)]
        prev, rows = hsi, HID_PAD
    aux_last = prev

    # fused heads (mean | log_std | mean-for-tanh | aux-logit column layout).
    A = cfg["output_size"]
    X = cfg["aux_output_size"]
    wm, bm = raw["last_main"]
    wl, bl = raw["last_log_std"]
    wa, ba = raw["last_aux"]
    w_hm = np.zeros((HID_PAD, LANE), np.float32)
    w_hm[:main_last, 0:A] = wm
    w_hm[:main_last, A:2 * A] = wl
    w_hm[:main_last, 2 * A:3 * A] = wm
    w_ha = np.zeros((HID_PAD, LANE), np.float32)
    w_ha[:aux_last, 3 * A:3 * A + X] = wa
    b_h = np.zeros((1, LANE), np.float32)
    b_h[0, 0:A] = bm
    b_h[0, A:2 * A] = bl
    b_h[0, 2 * A:3 * A] = bm
    b_h[0, 3 * A:3 * A + X] = ba
    packed += [jnp.asarray(w_hm, jnp.bfloat16), jnp.asarray(w_ha, jnp.bfloat16),
               jnp.asarray(b_h, jnp.float32)]
    return packed


# --------------------------------- forward --------------------------------- #

def script_policy_forward(obs, packed, *, cfg):
    """Whole ScriptPolicy.forward in one fused Pallas kernel.
    Returns (mean, std, h_aux, tanh(mean)) like the torch module."""
    B = obs.shape[0]
    conv_len = cfg["input_channels"] * cfg["input_height"] * cfg["input_width"]
    add = cfg["added_fc_input_size"]
    A = cfg["output_size"]
    X = cfg["aux_output_size"]
    assert 3 * A + X <= LANE

    Bp = max(8, ((B + 7) // 8) * 8)                       # sublane-dense rows
    xc = jnp.pad(obs[:, :conv_len], ((0, Bp - B), (0, 0)))
    xe = jnp.pad(obs[:, conv_len:conv_len + add],
                 ((0, Bp - B), (0, EXTRA_PAD - add)))

    kernel = make_fused_kernel(
        n_conv=len(cfg["n_channels"]),
        n_main=len(cfg["hidden_sizes_main"]),
        n_aux=len(cfg["hidden_sizes_aux"]),
        out_size=A, aux_size=X)

    vmem = pl.BlockSpec(memory_space=pltpu.MemorySpace.VMEM)
    slab = pl.pallas_call(
        kernel,
        out_shape=jax.ShapeDtypeStruct((Bp, LANE), jnp.float32),
        in_specs=[vmem] * (2 + len(packed)),
        out_specs=vmem,
    )(xc, xe, *packed)
    # TODO(synk): for large batches, tile Bp with an M-dim grid and
    # compiler_params=pltpu.CompilerParams(dimension_semantics=("parallel",)) so
    # v7x's two TensorCores split the rows; at B=2 gridless is lowest latency.

    mean = slab[:B, 0:A]
    std = slab[:B, A:2 * A]
    tanh_mean = slab[:B, 2 * A:3 * A]
    h_aux = slab[:B, 3 * A:3 * A + X]
    return mean, std, h_aux, tanh_mean


# --------------------------- pure-JAX f32 reference ------------------------ #

def reference_forward(obs, raw, cfg):
    B = obs.shape[0]
    C, H, W = cfg["input_channels"], cfg["input_height"], cfg["input_width"]
    conv_len = C * H * W
    x = obs[:, :conv_len].reshape(B, C, H, W)
    for wgt, bias, s, p in raw["conv"]:
        x = jax.lax.conv_general_dilated(
            x, jnp.asarray(wgt), window_strides=(s, s),
            padding=[(p, p), (p, p)],
            dimension_numbers=("NCHW", "OIHW", "NCHW"))
        x = jax.nn.relu(x + jnp.asarray(bias).reshape(1, -1, 1, 1))
    flat = x.reshape(B, -1)
    h_main, h_aux = flat, flat
    if cfg["added_fc_input_size"]:
        extra = obs[:, conv_len:conv_len + cfg["added_fc_input_size"]]
        h_main = jnp.concatenate([h_main, extra], axis=1)
    for wi, bi in raw["main"]:
        h_main = jax.nn.relu(h_main @ jnp.asarray(wi) + jnp.asarray(bi))
    for wi, bi in raw["aux"]:
        h_aux = jax.nn.relu(h_aux @ jnp.asarray(wi) + jnp.asarray(bi))
    wm, bm = raw["last_main"]
    wl, bl = raw["last_log_std"]
    wa, ba = raw["last_aux"]
    mean = h_main @ jnp.asarray(wm) + jnp.asarray(bm)
    log_std = jnp.clip(h_main @ jnp.asarray(wl) + jnp.asarray(bl), -20.0, 2.0)
    std = jnp.exp(log_std)
    aux = jax.nn.sigmoid(h_aux @ jnp.asarray(wa) + jnp.asarray(ba))
    return mean, std, aux, jnp.tanh(mean)


# ----------------------------------- main ----------------------------------- #

if __name__ == "__main__":
    cfg = CFG
    key = jax.random.PRNGKey(0)
    key, pkey, okey = jax.random.split(key, 3)

    raw = init_params(pkey, cfg)
    packed = pack_params(raw, cfg)

    B = 2
    obs_dim = (cfg["input_channels"] * cfg["input_height"] * cfg["input_width"]
               + cfg["added_fc_input_size"])
    obs = jax.random.normal(okey, (B, obs_dim), dtype=jnp.float32)

    forward = jax.jit(functools.partial(script_policy_forward, cfg=cfg))
    mean, std, h_aux, tanh_mean = forward(obs, packed)
    jax.block_until_ready((mean, std, h_aux, tanh_mean))

    # shape / sanity checks
    assert mean.shape == (B, cfg["output_size"])
    assert std.shape == (B, cfg["output_size"])
    assert h_aux.shape == (B, cfg["aux_output_size"])
    assert tanh_mean.shape == (B, cfg["output_size"])
    assert bool(jnp.all(std > 0.0))
    assert bool(jnp.all((h_aux > 0.0) & (h_aux < 1.0)))
    assert bool(jnp.all(jnp.isfinite(mean)))

    # numerical check vs. a pure-JAX f32 reference (loose tol for the bf16 MXU path)
    r_mean, r_std, r_aux, r_tanh = reference_forward(obs, raw, cfg)
    for got, ref in ((mean, r_mean), (std, r_std),
                     (h_aux, r_aux), (tanh_mean, r_tanh)):
        np.testing.assert_allclose(np.asarray(got), np.asarray(ref),
                                   rtol=2e-2, atol=2e-2)

    print("KERNEL_OK")
</pallas_src>

<mosaic_0001>
module attributes {stable_mosaic.version = 11 : i64} {
  func.func @kernel(%arg0: memref<8x1024xf32, #tpu.memory_space<vmem>>, %arg1: memref<8x16xf32, #tpu.memory_space<vmem>>, %arg2: memref<1024x512xbf16, #tpu.memory_space<vmem>>, %arg3: memref<1x512xf32, #tpu.memory_space<vmem>>, %arg4: memref<512x256xbf16, #tpu.memory_space<vmem>>, %arg5: memref<1x256xf32, #tpu.memory_space<vmem>>, %arg6: memref<256x128xbf16, #tpu.memory_space<vmem>>, %arg7: memref<16x128xbf16, #tpu.memory_space<vmem>>, %arg8: memref<1x128xf32, #tpu.memory_space<vmem>>, %arg9: memref<256x128xbf16, #tpu.memory_space<vmem>>, %arg10: memref<1x128xf32, #tpu.memory_space<vmem>>, %arg11: memref<128x128xbf16, #tpu.memory_space<vmem>>, %arg12: memref<128x128xbf16, #tpu.memory_space<vmem>>, %arg13: memref<1x128xf32, #tpu.memory_space<vmem>>, %arg14: memref<8x128xf32, #tpu.memory_space<vmem>>) attributes {dimension_semantics = [], scalar_prefetch = 0 : i64, scratch_operands = 0 : i64, tpu.core_type = #tpu.core_type<tc>} {
    %c0 = arith.constant 0 : index
    %c0_0 = arith.constant 0 : index
    %0 = vector.load %arg0[%c0, %c0_0] : memref<8x1024xf32, #tpu.memory_space<vmem>>, vector<8x1024xf32>
    %1 = arith.truncf %0 : vector<8x1024xf32> to vector<8x1024xbf16>
    %c0_1 = arith.constant 0 : index
    %c0_2 = arith.constant 0 : index
    %2 = vector.load %arg1[%c0_1, %c0_2] : memref<8x16xf32, #tpu.memory_space<vmem>>, vector<8x16xf32>
    %3 = arith.truncf %2 : vector<8x16xf32> to vector<8x16xbf16>
    %c0_3 = arith.constant 0 : index
    %c0_4 = arith.constant 0 : index
    %4 = vector.load %arg2[%c0_3, %c0_4] : memref<1024x512xbf16, #tpu.memory_space<vmem>>, vector<1024x512xbf16>
    %c0_5 = arith.constant 0 : index
    %c0_6 = arith.constant 0 : index
    %5 = vector.load %arg3[%c0_5, %c0_6] : memref<1x512xf32, #tpu.memory_space<vmem>>, vector<1x512xf32>
    %cst = arith.constant dense<0.000000e+00> : vector<8x512xf32>
    %6 = tpu.matmul %1, %4, %cst {dimension_numbers = #tpu.dot_dimension_numbers<[1], [0], [0], [1], [0, 0, 1, 1], [], []>} : vector<8x1024xbf16>, vector<1024x512xbf16>, vector<8x512xf32> -> vector<8x512xf32>
    %7 = vector.broadcast %5 : vector<1x512xf32> to vector<8x512xf32>
    %8 = arith.addf %6, %7 : vector<8x512xf32>
    %cst_7 = arith.constant 0.000000e+00 : f32
    %9 = vector.broadcast %cst_7 : f32 to vector<8x512xf32>
    %10 = arith.maximumf %8, %9 : vector<8x512xf32>
    %11 = arith.truncf %10 : vector<8x512xf32> to vector<8x512xbf16>
    %c0_8 = arith.constant 0 : index
    %c0_9 = arith.constant 0 : index
    %12 = vector.load %arg4[%c0_8, %c0_9] : memref<512x256xbf16, #tpu.memory_space<vmem>>, vector<512x256xbf16>
    %c0_10 = arith.constant 0 : index
    %c0_11 = arith.constant 0 : index
    %13 = vector.load %arg5[%c0_10, %c0_11] : memref<1x256xf32, #tpu.memory_space<vmem>>, vector<1x256xf32>
    %cst_12 = arith.constant dense<0.000000e+00> : vector<8x256xf32>
    %14 = tpu.matmul %11, %12, %cst_12 {dimension_numbers = #tpu.dot_dimension_numbers<[1], [0], [0], [1], [0, 0, 1, 1], [], []>} : vector<8x512xbf16>, vector<512x256xbf16>, vector<8x256xf32> -> vector<8x256xf32>
    %15 = vector.broadcast %13 : vector<1x256xf32> to vector<8x256xf32>
    %16 = arith.addf %14, %15 : vector<8x256xf32>
    %cst_13 = arith.constant 0.000000e+00 : f32
    %17 = vector.broadcast %cst_13 : f32 to vector<8x256xf32>
    %18 = arith.maximumf %16, %17 : vector<8x256xf32>
    %19 = arith.truncf %18 : vector<8x256xf32> to vector<8x256xbf16>
    %c0_14 = arith.constant 0 : index
    %c0_15 = arith.constant 0 : index
    %20 = vector.load %arg6[%c0_14, %c0_15] : memref<256x128xbf16, #tpu.memory_space<vmem>>, vector<256x128xbf16>
    %c0_16 = arith.constant 0 : index
    %c0_17 = arith.constant 0 : index
    %21 = vector.load %arg7[%c0_16, %c0_17] : memref<16x128xbf16, #tpu.memory_space<vmem>>, vector<16x128xbf16>
    %c0_18 = arith.constant 0 : index
    %c0_19 = arith.constant 0 : index
    %22 = vector.load %arg8[%c0_18, %c0_19] : memref<1x128xf32, #tpu.memory_space<vmem>>, vector<1x128xf32>
    %cst_20 = arith.constant dense<0.000000e+00> : vector<8x128xf32>
    %23 = tpu.matmul %19, %20, %cst_20 {dimension_numbers = #tpu.dot_dimension_numbers<[1], [0], [0], [1], [0, 0, 1, 1], [], []>} : vector<8x256xbf16>, vector<256x128xbf16>, vector<8x128xf32> -> vector<8x128xf32>
    %cst_21 = arith.constant dense<0.000000e+00> : vector<8x128xf32>
    %24 = tpu.matmul %3, %21, %cst_21 {dimension_numbers = #tpu.dot_dimension_numbers<[1], [0], [0], [1], [0, 0, 1, 1], [], []>} : vector<8x16xbf16>, vector<16x128xbf16>, vector<8x128xf32> -> vector<8x128xf32>
    %25 = arith.addf %23, %24 : vector<8x128xf32>
    %26 = vector.broadcast %22 : vector<1x128xf32> to vector<8x128xf32>
    %27 = arith.addf %25, %26 : vector<8x128xf32>
    %cst_22 = arith.constant 0.000000e+00 : f32
    %28 = vector.broadcast %cst_22 : f32 to vector<8x128xf32>
    %29 = arith.maximumf %27, %28 : vector<8x128xf32>
    %30 = arith.truncf %29 : vector<8x128xf32> to vector<8x128xbf16>
    %c0_23 = arith.constant 0 : index
    %c0_24 = arith.constant 0 : index
    %31 = vector.load %arg9[%c0_23, %c0_24] : memref<256x128xbf16, #tpu.memory_space<vmem>>, vector<256x128xbf16>
    %c0_25 = arith.constant 0 : index
    %c0_26 = arith.constant 0 : index
    %32 = vector.load %arg10[%c0_25, %c0_26] : memref<1x128xf32, #tpu.memory_space<vmem>>, vector<1x128xf32>
    %cst_27 = arith.constant dense<0.000000e+00> : vector<8x128xf32>
    %33 = tpu.matmul %19, %31, %cst_27 {dimension_numbers = #tpu.dot_dimension_numbers<[1], [0], [0], [1], [0, 0, 1, 1], [], []>} : vector<8x256xbf16>, vector<256x128xbf16>, vector<8x128xf32> -> vector<8x128xf32>
    %34 = vector.broadcast %32 : vector<1x128xf32> to vector<8x128xf32>
    %35 = arith.addf %33, %34 : vector<8x128xf32>
    %cst_28 = arith.constant 0.000000e+00 : f32
    %36 = vector.broadcast %cst_28 : f32 to vector<8x128xf32>
    %37 = arith.maximumf %35, %36 : vector<8x128xf32>
    %38 = arith.truncf %37 : vector<8x128xf32> to vector<8x128xbf16>
    %c0_29 = arith.constant 0 : index
    %c0_30 = arith.constant 0 : index
    %39 = vector.load %arg11[%c0_29, %c0_30] : memref<128x128xbf16, #tpu.memory_space<vmem>>, vector<128x128xbf16>
    %c0_31 = arith.constant 0 : index
    %c0_32 = arith.constant 0 : index
    %40 = vector.load %arg12[%c0_31, %c0_32] : memref<128x128xbf16, #tpu.memory_space<vmem>>, vector<128x128xbf16>
    %c0_33 = arith.constant 0 : index
    %c0_34 = arith.constant 0 : index
    %41 = vector.load %arg13[%c0_33, %c0_34] : memref<1x128xf32, #tpu.memory_space<vmem>>, vector<1x128xf32>
    %cst_35 = arith.constant dense<0.000000e+00> : vector<8x128xf32>
    %42 = tpu.matmul %30, %39, %cst_35 {dimension_numbers = #tpu.dot_dimension_numbers<[1], [0], [0], [1], [0, 0, 1, 1], [], []>} : vector<8x128xbf16>, vector<128x128xbf16>, vector<8x128xf32> -> vector<8x128xf32>
    %cst_36 = arith.constant dense<0.000000e+00> : vector<8x128xf32>
    %43 = tpu.matmul %38, %40, %cst_36 {dimension_numbers = #tpu.dot_dimension_numbers<[1], [0], [0], [1], [0, 0, 1, 1], [], []>} : vector<8x128xbf16>, vector<128x128xbf16>, vector<8x128xf32> -> vector<8x128xf32>
    %44 = arith.addf %42, %43 : vector<8x128xf32>
    %45 = vector.broadcast %41 : vector<1x128xf32> to vector<8x128xf32>
    %46 = arith.addf %44, %45 : vector<8x128xf32>
    %47 = tpu.iota {dimensions = array<i32: 1>} : vector<8x128xi32>
    %cst_37 = arith.constant -2.000000e+01 : f32
    %cst_38 = arith.constant 2.000000e+00 : f32
    %48 = vector.broadcast %cst_37 : f32 to vector<8x128xf32>
    %49 = arith.maximumf %48, %46 : vector<8x128xf32>
    %50 = vector.broadcast %cst_38 : f32 to vector<8x128xf32>
    %51 = arith.minimumf %50, %49 : vector<8x128xf32>
    %52 = math.exp %51 : vector<8x128xf32>
    %c4_i32 = arith.constant 4 : i32
    %53 = vector.broadcast %c4_i32 : i32 to vector<8x128xi32>
    %54 = arith.cmpi slt, %47, %53 : vector<8x128xi32>
    %c8_i32 = arith.constant 8 : i32
    %55 = vector.broadcast %c8_i32 : i32 to vector<8x128xi32>
    %56 = arith.cmpi slt, %47, %55 : vector<8x128xi32>
    %c12_i32 = arith.constant 12 : i32
    %57 = vector.broadcast %c12_i32 : i32 to vector<8x128xi32>
    %58 = arith.cmpi slt, %47, %57 : vector<8x128xi32>
    %59 = math.tanh %46 : vector<8x128xf32>
    %c13_i32 = arith.constant 13 : i32
    %60 = vector.broadcast %c13_i32 : i32 to vector<8x128xi32>
    %61 = arith.cmpi slt, %47, %60 : vector<8x128xi32>
    %62 = arith.negf %46 : vector<8x128xf32>
    %63 = math.exp %62 : vector<8x128xf32>
    %cst_39 = arith.constant 1.000000e+00 : f32
    %64 = vector.broadcast %cst_39 : f32 to vector<8x128xf32>
    %65 = arith.addf %64, %63 : vector<8x128xf32>
    %66 = arith.divf %64, %65 : vector<8x128xf32>
    %cst_40 = arith.constant 0.000000e+00 : f32
    %67 = vector.broadcast %cst_40 : f32 to vector<8x128xf32>
    %68 = arith.select %61, %66, %67 : vector<8x128xi1>, vector<8x128xf32>
    %69 = arith.select %58, %59, %68 : vector<8x128xi1>, vector<8x128xf32>
    %70 = arith.select %56, %52, %69 : vector<8x128xi1>, vector<8x128xf32>
    %71 = arith.select %54, %46, %70 : vector<8x128xi1>, vector<8x128xf32>
    %c0_41 = arith.constant 0 : index
    %c0_42 = arith.constant 0 : index
    %72 = vector.load %arg14[%c0_41, %c0_42] : memref<8x128xf32, #tpu.memory_space<vmem>>, vector<8x128xf32>
    tpu.vector_store %arg14[%c0_41, %c0_42], %71 {strides = array<i32>} : memref<8x128xf32, #tpu.memory_space<vmem>>, vector<8x128xf32>,
    return
  }
}

</mosaic_0001>

<llo_original>
// kernel: script_policy_forward.1
$region0: #{script_policy_forward.1}
  #allocation0 [shape = 'u32[]', space=smem, size = 0x4, offset = 0x4, fixed_abs, tag = 'smem constant byte address 0x4 - core index']
  #allocation1 [shape = 'u32[72,128]{1,0:T(1,128)}', space=vmem, size = 0x9000, scoped, tag = 'internal scratch']
  %s0 = inlined_call_operand.vmem [shape: f32[8,1024], index: 0, kind: input, shape index: {}]
  %s1 = inlined_call_operand.vmem [shape: f32[8,16], index: 1, kind: input, shape index: {}]
  %s2 = inlined_call_operand.hbm [shape: bf16[1024,512], index: 2, kind: input, shape index: {}]
  %s3 = inlined_call_operand.vmem [shape: f32[1,512], index: 3, kind: input, shape index: {}]
  %s4 = inlined_call_operand.hbm [shape: bf16[512,256], index: 4, kind: input, shape index: {}]
  %s5 = inlined_call_operand.vmem [shape: f32[1,256], index: 5, kind: input, shape index: {}]
  %s6 = inlined_call_operand.hbm [shape: bf16[256,128], index: 6, kind: input, shape index: {}]
  %s7 = inlined_call_operand.vmem [shape: bf16[16,128], index: 7, kind: input, shape index: {}]
  %s8 = inlined_call_operand.vmem [shape: f32[1,128], index: 8, kind: input, shape index: {}]
  %s9 = inlined_call_operand.hbm [shape: bf16[256,128], index: 9, kind: input, shape index: {}]
  %s10 = inlined_call_operand.vmem [shape: f32[1,128], index: 10, kind: input, shape index: {}]
  %s11 = inlined_call_operand.vmem [shape: bf16[128,128], index: 11, kind: input, shape index: {}]
  %s12 = inlined_call_operand.hbm [shape: bf16[128,128], index: 12, kind: input, shape index: {}]
  %s13 = inlined_call_operand.vmem [shape: f32[1,128], index: 13, kind: input, shape index: {}]
  %s14 = inlined_call_operand.vmem [shape: f32[8,128], index: 14, kind: output, shape index: {}]
  %s15 = sld [smem:[#allocation0]]
  $region86: #{script_policy_forward.1} parent=0
    _
  %s17 = ssub.s32 1, %s15
  %s18 = scalar_select 0, %s17, %s15
  $region1: #{script_policy_forward.1} parent=0
    #allocation2 [shape = 'u8[1048576]{0}', space=vmem, size = 0x100000, scoped, tag = 'input window, operand 2, single buffered']
    #allocation3 [shape = 's32[1]{0}', space=sflag, size = 0x4, scoped, tag = 'scoped memory for script_policy_forward.1']
    #allocation4 [shape = 'u8[262144]{0}', space=vmem, size = 0x40000, scoped, tag = 'input window, operand 4, single buffered']
    #allocation5 [shape = 's32[1]{0}', space=sflag, size = 0x4, scoped, tag = 'scoped memory for script_policy_forward.1']
    #allocation6 [shape = 'u8[65536]{0}', space=vmem, size = 0x10000, scoped, tag = 'input window, operand 6, single buffered']
    #allocation7 [shape = 'u8[65536]{0}', space=vmem, size = 0x10000, scoped, tag = 'input window, operand 9, single buffered']
    #allocation8 [shape = 's32[1]{0}', space=sflag, size = 0x4, scoped, tag = 'scoped memory for script_policy_forward.1']
    #allocation9 [shape = 'u8[32768]{0}', space=vmem, size = 0x8000, scoped, tag = 'input window, operand 12, single buffered']
    %19 = vsyncpa [#allocation3], 0
    %20 = vsyncpa [#allocation5], 0
    %21 = vsyncpa [#allocation8], 0
    // Predicated region
    $region2: #{script_policy_forward.1} parent=1 // pred_check
      _
    $region3: #{script_policy_forward.1} parent=1 // pred_check_branch
      %23 = sbr.rel (0) target = $region5
    $region4: #{script_policy_forward.1} parent=1 // pred_region
      _
    $region5: #{script_policy_forward.1} parent=1 // pred_fallthru
      _
    // Predicated region
    $region6: #{script_policy_forward.1} parent=1 // pred_check
      _
    $region7: #{script_policy_forward.1} parent=1 // pred_check_branch
      %25 = sbr.rel (0) target = $region9
    $region8: #{script_policy_forward.1} parent=1 // pred_region
      _
    $region9: #{script_policy_forward.1} parent=1 // pred_fallthru
      _
    // Predicated region
    $region10: #{script_policy_forward.1} parent=1 // pred_check
      _
    $region11: #{script_policy_forward.1} parent=1 // pred_check_branch
      %27 = sbr.rel (0) target = $region13
    $region12: #{script_policy_forward.1} parent=1 // pred_region
      %29 = vsyncadd [#allocation3], 0
      %s30 = sshll.u32 %s2, 4
      %s31 = int_to_ptr.hbm [resolvable:$true] %s30
      %s32 = sshll.u32 [#allocation2], 4
      %s33 = int_to_ptr.vmem [resolvable:$true] %s32
      %38 = dma.hbm_to_vmem [thread:$0]  %s31, 32768, %s33, [#allocation3], 256, 256, 16
    $region13: #{script_policy_forward.1} parent=1 // pred_fallthru
      _
    // Predicated region
    $region14: #{script_policy_forward.1} parent=1 // pred_check
      _
    $region15: #{script_policy_forward.1} parent=1 // pred_check_branch
      %40 = sbr.rel (0) target = $region17
    $region16: #{script_policy_forward.1} parent=1 // pred_region
      _
    $region17: #{script_policy_forward.1} parent=1 // pred_fallthru
      _
    // Predicated region
    $region18: #{script_policy_forward.1} parent=1 // pred_check
      _
    $region19: #{script_policy_forward.1} parent=1 // pred_check_branch
      %42 = sbr.rel (0) target = $region21
    $region20: #{script_policy_forward.1} parent=1 // pred_region
      %44 = vsyncadd [#allocation5], 0
      %s45 = sshll.u32 %s4, 4
      %s46 = int_to_ptr.hbm [resolvable:$true] %s45
      %s47 = sshll.u32 [#allocation4], 4
      %s48 = int_to_ptr.vmem [resolvable:$true] %s47
      %53 = dma.hbm_to_vmem [thread:$0]  %s46, 8192, %s48, [#allocation5], 128, 128, 8
    $region21: #{script_policy_forward.1} parent=1 // pred_fallthru
      _
    // Predicated region
    $region22: #{script_policy_forward.1} parent=1 // pred_check
      _
    $region23: #{script_policy_forward.1} parent=1 // pred_check_branch
      %55 = sbr.rel (0) target = $region25
    $region24: #{script_policy_forward.1} parent=1 // pred_region
      _
    $region25: #{script_policy_forward.1} parent=1 // pred_fallthru
      _
    // Predicated region
    $region26: #{script_policy_forward.1} parent=1 // pred_check
      _
    $region27: #{script_policy_forward.1} parent=1 // pred_check_branch
      %57 = sbr.rel (0) target = $region29
    $region28: #{script_policy_forward.1} parent=1 // pred_region
      %59 = vsyncadd [#allocation5], 0
      %s60 = sshll.u32 %s6, 4
      %s61 = int_to_ptr.hbm [resolvable:$true] %s60
      %s62 = sshll.u32 [#allocation6], 4
      %s63 = int_to_ptr.vmem [resolvable:$true] %s62
      %68 = dma.hbm_to_vmem [thread:$0]  %s61, 2048, %s63, [#allocation5], 64, 64, 4
    $region29: #{script_policy_forward.1} parent=1 // pred_fallthru
      _
    // Predicated region
    $region30: #{script_policy_forward.1} parent=1 // pred_check
      _
    $region31: #{script_policy_forward.1} parent=1 // pred_check_branch
      %70 = sbr.rel (0) target = $region33
    $region32: #{script_policy_forward.1} parent=1 // pred_region
      _
    $region33: #{script_policy_forward.1} parent=1 // pred_fallthru
      _
    // Predicated region
    $region34: #{script_policy_forward.1} parent=1 // pred_check
      _
    $region35: #{script_policy_forward.1} parent=1 // pred_check_branch
      %72 = sbr.rel (0) target = $region37
    $region36: #{script_policy_forward.1} parent=1 // pred_region
      _
    $region37: #{script_policy_forward.1} parent=1 // pred_fallthru
      _
    // Predicated region
    $region38: #{script_policy_forward.1} parent=1 // pred_check
      _
    $region39: #{script_policy_forward.1} parent=1 // pred_check_branch
      %74 = sbr.rel (0) target = $region41
    $region40: #{script_policy_forward.1} parent=1 // pred_region
      %76 = vsyncadd [#allocation8], 0
      %s77 = sshll.u32 %s9, 4
      %s78 = int_to_ptr.hbm [resolvable:$true] %s77
      %s79 = sshll.u32 [#allocation7], 4
      %s80 = int_to_ptr.vmem [resolvable:$true] %s79
      %85 = dma.hbm_to_vmem [thread:$0]  %s78, 2048, %s80, [#allocation8], 64, 64, 4
    $region41: #{script_policy_forward.1} parent=1 // pred_fallthru
      _
    // Predicated region
    $region42: #{script_policy_forward.1} parent=1 // pred_check
      _
    $region43: #{script_policy_forward.1} parent=1 // pred_check_branch
      %87 = sbr.rel (0) target = $region45
    $region44: #{script_policy_forward.1} parent=1 // pred_region
      _
    $region45: #{script_policy_forward.1} parent=1 // pred_fallthru
      _
    // Predicated region
    $region46: #{script_policy_forward.1} parent=1 // pred_check
      _
    $region47: #{script_policy_forward.1} parent=1 // pred_check_branch
      %89 = sbr.rel (0) target = $region49
    $region48: #{script_policy_forward.1} parent=1 // pred_region
      _
    $region49: #{script_policy_forward.1} parent=1 // pred_fallthru
      _
    // Predicated region
    $region50: #{script_policy_forward.1} parent=1 // pred_check
      _
    $region51: #{script_policy_forward.1} parent=1 // pred_check_branch
      %91 = sbr.rel (0) target = $region53
    $region52: #{script_policy_forward.1} parent=1 // pred_region
      %93 = vsyncadd [#allocation8], 0
      %s94 = sshll.u32 %s12, 4
      %s95 = int_to_ptr.hbm [resolvable:$true] %s94
      %s96 = sshll.u32 [#allocation9], 4
      %s97 = int_to_ptr.vmem [resolvable:$true] %s96
      %102 = dma.hbm_to_vmem [thread:$0]  %s95, 1024, %s97, [#allocation8], 64, 64, 4
    $region53: #{script_policy_forward.1} parent=1 // pred_fallthru
      _
    // Predicated region
    $region54: #{script_policy_forward.1} parent=1 // pred_check
      _
    $region55: #{script_policy_forward.1} parent=1 // pred_check_branch
      %104 = sbr.rel (0) target = $region57
    $region56: #{script_policy_forward.1} parent=1 // pred_region
      _
    $region57: #{script_policy_forward.1} parent=1 // pred_fallthru
      _
    // Predicated region
    $region58: #{script_policy_forward.1} parent=1 // pred_check
      _
    $region59: #{script_policy_forward.1} parent=1 // pred_check_branch
      %106 = sbr.rel (0) target = $region61
    $region60: #{script_policy_forward.1} parent=1 // pred_region
      %108 = dma.done [#allocation3], 32768
    $region61: #{script_policy_forward.1} parent=1 // pred_fallthru
      _
    // Predicated region
    $region62: #{script_policy_forward.1} parent=1 // pred_check
      _
    $region63: #{script_policy_forward.1} parent=1 // pred_check_branch
      %110 = sbr.rel (0) target = $region65
    $region64: #{script_policy_forward.1} parent=1 // pred_region
      %112 = dma.done [#allocation5], 8192
    $region65: #{script_policy_forward.1} parent=1 // pred_fallthru
      _
    // Predicated region
    $region66: #{script_policy_forward.1} parent=1 // pred_check
      _
    $region67: #{script_policy_forward.1} parent=1 // pred_check_branch
      %114 = sbr.rel (0) target = $region69
    $region68: #{script_policy_forward.1} parent=1 // pred_region
      %116 = dma.done [#allocation5], 2048
    $region69: #{script_policy_forward.1} parent=1 // pred_fallthru
      _
    // Predicated region
    $region70: #{script_policy_forward.1} parent=1 // pred_check
      _
    $region71: #{script_policy_forward.1} parent=1 // pred_check_branch
      %118 = sbr.rel (0) target = $region73
    $region72: #{script_policy_forward.1} parent=1 // pred_region
      %120 = dma.done [#allocation8], 2048
    $region73: #{script_policy_forward.1} parent=1 // pred_fallthru
      _
    // Predicated region
    $region74: #{script_policy_forward.1} parent=1 // pred_check
      _
    $region75: #{script_policy_forward.1} parent=1 // pred_check_branch
      %122 = sbr.rel (0) target = $region77
    $region76: #{script_policy_forward.1} parent=1 // pred_region
      %124 = dma.done [#allocation8], 1024
    $region77: #{script_policy_forward.1} parent=1 // pred_fallthru
      _
    %v126 = vld [vmem:[%s0] sm:$0xff]
    %v127 = vld [vmem:[%s0 + $0x8] sm:$0xff]
    %v128 = vld [vmem:[%s0 + $0x10] sm:$0xff]
    %v129 = vld [vmem:[%s0 + $0x18] sm:$0xff]
    %v130 = vld [vmem:[%s0 + $0x20] sm:$0xff]
    %v131 = vld [vmem:[%s0 + $0x28] sm:$0xff]
    %v132 = vld [vmem:[%s0 + $0x30] sm:$0xff]
    %v133 = vld [vmem:[%s0 + $0x38] sm:$0xff]
    %v134 = vpack.c.bf16 %v126, %v126
    %v135 = vpack.c.bf16 %v127, %v127
    %v136 = vpack.c.bf16 %v128, %v128
    %v137 = vpack.c.bf16 %v129, %v129
    %v138 = vpack.c.bf16 %v130, %v130
    %v139 = vpack.c.bf16 %v131, %v131
    %v140 = vpack.c.bf16 %v132, %v132
    %v141 = vpack.c.bf16 %v133, %v133
    %v142 = vld [vmem:[%s1] sm:$0xff]
    %v143 = vpack.c.bf16 %v142, %v142
    %v144 = vld [vmem:[#allocation2] sm:$0xff]
    %v145 = vld [vmem:[#allocation2 + $0x8] sm:$0xff]
    %v146 = vld [vmem:[#allocation2 + $0x10] sm:$0xff]
    %v147 = vld [vmem:[#allocation2 + $0x18] sm:$0xff]
    %v148 = vld [vmem:[#allocation2 + $0x20] sm:$0xff]
    %v149 = vld [vmem:[#allocation2 + $0x28] sm:$0xff]
    %v150 = vld [vmem:[#allocation2 + $0x30] sm:$0xff]
    %v151 = vld [vmem:[#allocation2 + $0x38] sm:$0xff]
    %v152 = vld [vmem:[#allocation2 + $0x40] sm:$0xff]
    %v153 = vld [vmem:[#allocation2 + $0x48] sm:$0xff]
    %v154 = vld [vmem:[#allocation2 + $0x50] sm:$0xff]
    %v155 = vld [vmem:[#allocation2 + $0x58] sm:$0xff]
    %v156 = vld [vmem:[#allocation2 + $0x60] sm:$0xff]
    %v157 = vld [vmem:[#allocation2 + $0x68] sm:$0xff]
    %v158 = vld [vmem:[#allocation2 + $0x70] sm:$0xff]
    %v159 = vld [vmem:[#allocation2 + $0x78] sm:$0xff]
    %v160 = vld [vmem:[#allocation2 + $0x80] sm:$0xff]
    %v161 = vld [vmem:[#allocation2 + $0x88] sm:$0xff]
    %v162 = vld [vmem:[#allocation2 + $0x90] sm:$0xff]
    %v163 = vld [vmem:[#allocation2 + $0x98] sm:$0xff]
    %v164 = vld [vmem:[#allocation2 + $0xa0] sm:$0xff]
    %v165 = vld [vmem:[#allocation2 + $0xa8] sm:$0xff]
    %v166 = vld [vmem:[#allocation2 + $0xb0] sm:$0xff]
    %v167 = vld [vmem:[#allocation2 + $0xb8] sm:$0xff]
    %v168 = vld [vmem:[#allocation2 + $0xc0] sm:$0xff]
    %v169 = vld [vmem:[#allocation2 + $0xc8] sm:$0xff]
    %v170 = vld [vmem:[#allocation2 + $0xd0] sm:$0xff]
    %v171 = vld [vmem:[#allocation2 + $0xd8] sm:$0xff]
    %v172 = vld [vmem:[#allocation2 + $0xe0] sm:$0xff]
    %v173 = vld [vmem:[#allocation2 + $0xe8] sm:$0xff]
    %v174 = vld [vmem:[#allocation2 + $0xf0] sm:$0xff]
    %v175 = vld [vmem:[#allocation2 + $0xf8] sm:$0xff]
    %v176 = vld [vmem:[#allocation2 + $0x100] sm:$0xff]
    %v177 = vld [vmem:[#allocation2 + $0x108] sm:$0xff]
    %v178 = vld [vmem:[#allocation2 + $0x110] sm:$0xff]
    %v179 = vld [vmem:[#allocation2 + $0x118] sm:$0xff]
    %v180 = vld [vmem:[#allocation2 + $0x120] sm:$0xff]
    %v181 = vld [vmem:[#allocation2 + $0x128] sm:$0xff]
    %v182 = vld [vmem:[#allocation2 + $0x130] sm:$0xff]
    %v183 = vld [vmem:[#allocation2 + $0x138] sm:$0xff]
    %v184 = vld [vmem:[#allocation2 + $0x140] sm:$0xff]
    %v185 = vld [vmem:[#allocation2 + $0x148] sm:$0xff]
    %v186 = vld [vmem:[#allocation2 + $0x150] sm:$0xff]
    %v187 = vld [vmem:[#allocation2 + $0x158] sm:$0xff]
    %v188 = vld [vmem:[#allocation2 + $0x160] sm:$0xff]
    %v189 = vld [vmem:[#allocation2 + $0x168] sm:$0xff]
    %v190 = vld [vmem:[#allocation2 + $0x170] sm:$0xff]
    %v191 = vld [vmem:[#allocation2 + $0x178] sm:$0xff]
    %v192 = vld [vmem:[#allocation2 + $0x180] sm:$0xff]
    %v193 = vld [vmem:[#allocation2 + $0x188] sm:$0xff]
    %v194 = vld [vmem:[#allocation2 + $0x190] sm:$0xff]
    %v195 = vld [vmem:[#allocation2 + $0x198] sm:$0xff]
    %v196 = vld [vmem:[#allocation2 + $0x1a0] sm:$0xff]
    %v197 = vld [vmem:[#allocation2 + $0x1a8] sm:$0xff]
    %v198 = vld [vmem:[#allocation2 + $0x1b0] sm:$0xff]
    %v199 = vld [vmem:[#allocation2 + $0x1b8] sm:$0xff]
    %v200 = vld [vmem:[#allocation2 + $0x1c0] sm:$0xff]
    %v201 = vld [vmem:[#allocation2 + $0x1c8] sm:$0xff]
    %v202 = vld [vmem:[#allocation2 + $0x1d0] sm:$0xff]
    %v203 = vld [vmem:[#allocation2 + $0x1d8] sm:$0xff]
    %v204 = vld [vmem:[#allocation2 + $0x1e0] sm:$0xff]
    %v205 = vld [vmem:[#allocation2 + $0x1e8] sm:$0xff]
    %v206 = vld [vmem:[#allocation2 + $0x1f0] sm:$0xff]
    %v207 = vld [vmem:[#allocation2 + $0x1f8] sm:$0xff]
    %v208 = vld [vmem:[#allocation2 + $0x200] sm:$0xff]
    %v209 = vld [vmem:[#allocation2 + $0x208] sm:$0xff]
    %v210 = vld [vmem:[#allocation2 + $0x210] sm:$0xff]
    %v211 = vld [vmem:[#allocation2 + $0x218] sm:$0xff]
    %v212 = vld [vmem:[#allocation2 + $0x220] sm:$0xff]
    %v213 = vld [vmem:[#allocation2 + $0x228] sm:$0xff]
    %v214 = vld [vmem:[#allocation2 + $0x230] sm:$0xff]
    %v215 = vld [vmem:[#allocation2 + $0x238] sm:$0xff]
    %v216 = vld [vmem:[#allocation2 + $0x240] sm:$0xff]
    %v217 = vld [vmem:[#allocation2 + $0x248] sm:$0xff]
    %v218 = vld [vmem:[#allocation2 + $0x250] sm:$0xff]
    %v219 = vld [vmem:[#allocation2 + $0x258] sm:$0xff]
    %v220 = vld [vmem:[#allocation2 + $0x260] sm:$0xff]
    %v221 = vld [vmem:[#allocation2 + $0x268] sm:$0xff]
    %v222 = vld [vmem:[#allocation2 + $0x270] sm:$0xff]
    %v223 = vld [vmem:[#allocation2 + $0x278] sm:$0xff]
    %v224 = vld [vmem:[#allocation2 + $0x280] sm:$0xff]
    %v225 = vld [vmem:[#allocation2 + $0x288] sm:$0xff]
    %v226 = vld [vmem:[#allocation2 + $0x290] sm:$0xff]
    %v227 = vld [vmem:[#allocation2 + $0x298] sm:$0xff]
    %v228 = vld [vmem:[#allocation2 + $0x2a0] sm:$0xff]
    %v229 = vld [vmem:[#allocation2 + $0x2a8] sm:$0xff]
    %v230 = vld [vmem:[#allocation2 + $0x2b0] sm:$0xff]
    %v231 = vld [vmem:[#allocation2 + $0x2b8] sm:$0xff]
    %v232 = vld [vmem:[#allocation2 + $0x2c0] sm:$0xff]
    %v233 = vld [vmem:[#allocation2 + $0x2c8] sm:$0xff]
    %v234 = vld [vmem:[#allocation2 + $0x2d0] sm:$0xff]
    %v235 = vld [vmem:[#allocation2 + $0x2d8] sm:$0xff]
    %v236 = vld [vmem:[#allocation2 + $0x2e0] sm:$0xff]
    %v237 = vld [vmem:[#allocation2 + $0x2e8] sm:$0xff]
    %v238 = vld [vmem:[#allocation2 + $0x2f0] sm:$0xff]
    %v239 = vld [vmem:[#allocation2 + $0x2f8] sm:$0xff]
    %v240 = vld [vmem:[#allocation2 + $0x300] sm:$0xff]
    %v241 = vld [vmem:[#allocation2 + $0x308] sm:$0xff]
    %v242 = vld [vmem:[#allocation2 + $0x310] sm:$0xff]
    %v243 = vld [vmem:[#allocation2 + $0x318] sm:$0xff]
    %v244 = vld [vmem:[#allocation2 + $0x320] sm:$0xff]
    %v245 = vld [vmem:[#allocation2 + $0x328] sm:$0xff]
    %v246 = vld [vmem:[#allocation2 + $0x330] sm:$0xff]
    %v247 = vld [vmem:[#allocation2 + $0x338] sm:$0xff]
    %v248 = vld [vmem:[#allocation2 + $0x340] sm:$0xff]
    %v249 = vld [vmem:[#allocation2 + $0x348] sm:$0xff]
    %v250 = vld [vmem:[#allocation2 + $0x350] sm:$0xff]
    %v251 = vld [vmem:[#allocation2 + $0x358] sm:$0xff]
    %v252 = vld [vmem:[#allocation2 + $0x360] sm:$0xff]
    %v253 = vld [vmem:[#allocation2 + $0x368] sm:$0xff]
    %v254 = vld [vmem:[#allocation2 + $0x370] sm:$0xff]
    %v255 = vld [vmem:[#allocation2 + $0x378] sm:$0xff]
    %v256 = vld [vmem:[#allocation2 + $0x380] sm:$0xff]
    %v257 = vld [vmem:[#allocation2 + $0x388] sm:$0xff]
    %v258 = vld [vmem:[#allocation2 + $0x390] sm:$0xff]
    %v259 = vld [vmem:[#allocation2 + $0x398] sm:$0xff]
    %v260 = vld [vmem:[#allocation2 + $0x3a0] sm:$0xff]
    %v261 = vld [vmem:[#allocation2 + $0x3a8] sm:$0xff]
    %v262 = vld [vmem:[#allocation2 + $0x3b0] sm:$0xff]
    %v263 = vld [vmem:[#allocation2 + $0x3b8] sm:$0xff]
    %v264 = vld [vmem:[#allocation2 + $0x3c0] sm:$0xff]
    %v265 = vld [vmem:[#allocation2 + $0x3c8] sm:$0xff]
    %v266 = vld [vmem:[#allocation2 + $0x3d0] sm:$0xff]
    %v267 = vld [vmem:[#allocation2 + $0x3d8] sm:$0xff]
    %v268 = vld [vmem:[#allocation2 + $0x3e0] sm:$0xff]
    %v269 = vld [vmem:[#allocation2 + $0x3e8] sm:$0xff]
    %v270 = vld [vmem:[#allocation2 + $0x3f0] sm:$0xff]
    %v271 = vld [vmem:[#allocation2 + $0x3f8] sm:$0xff]
    %v272 = vld [vmem:[#allocation2 + $0x400] sm:$0xff]
    %v273 = vld [vmem:[#allocation2 + $0x408] sm:$0xff]
    %v274 = vld [vmem:[#allocation2 + $0x410] sm:$0xff]
    %v275 = vld [vmem:[#allocation2 + $0x418] sm:$0xff]
    %v276 = vld [vmem:[#allocation2 + $0x420] sm:$0xff]
    %v277 = vld [vmem:[#allocation2 + $0x428] sm:$0xff]
    %v278 = vld [vmem:[#allocation2 + $0x430] sm:$0xff]
    %v279 = vld [vmem:[#allocation2 + $0x438] sm:$0xff]
    %v280 = vld [vmem:[#allocation2 + $0x440] sm:$0xff]
    %v281 = vld [vmem:[#allocation2 + $0x448] sm:$0xff]
    %v282 = vld [vmem:[#allocation2 + $0x450] sm:$0xff]
    %v283 = vld [vmem:[#allocation2 + $0x458] sm:$0xff]
    %v284 = vld [vmem:[#allocation2 + $0x460] sm:$0xff]
    %v285 = vld [vmem:[#allocation2 + $0x468] sm:$0xff]
    %v286 = vld [vmem:[#allocation2 + $0x470] sm:$0xff]
    %v287 = vld [vmem:[#allocation2 + $0x478] sm:$0xff]
    %v288 = vld [vmem:[#allocation2 + $0x480] sm:$0xff]
    %v289 = vld [vmem:[#allocation2 + $0x488] sm:$0xff]
    %v290 = vld [vmem:[#allocation2 + $0x490] sm:$0xff]
    %v291 = vld [vmem:[#allocation2 + $0x498] sm:$0xff]
    %v292 = vld [vmem:[#allocation2 + $0x4a0] sm:$0xff]
    %v293 = vld [vmem:[#allocation2 + $0x4a8] sm:$0xff]
    %v294 = vld [vmem:[#allocation2 + $0x4b0] sm:$0xff]
    %v295 = vld [vmem:[#allocation2 + $0x4b8] sm:$0xff]
    %v296 = vld [vmem:[#allocation2 + $0x4c0] sm:$0xff]
    %v297 = vld [vmem:[#allocation2 + $0x4c8] sm:$0xff]
    %v298 = vld [vmem:[#allocation2 + $0x4d0] sm:$0xff]
    %v299 = vld [vmem:[#allocation2 + $0x4d8] sm:$0xff]
    %v300 = vld [vmem:[#allocation2 + $0x4e0] sm:$0xff]
    %v301 = vld [vmem:[#allocation2 + $0x4e8] sm:$0xff]
    %v302 = vld [vmem:[#allocation2 + $0x4f0] sm:$0xff]
    %v303 = vld [vmem:[#allocation2 + $0x4f8] sm:$0xff]
    %v304 = vld [vmem:[#allocation2 + $0x500] sm:$0xff]
    %v305 = vld [vmem:[#allocation2 + $0x508] sm:$0xff]
    %v306 = vld [vmem:[#allocation2 + $0x510] sm:$0xff]
    %v307 = vld [vmem:[#allocation2 + $0x518] sm:$0xff]
    %v308 = vld [vmem:[#allocation2 + $0x520] sm:$0xff]
    %v309 = vld [vmem:[#allocation2 + $0x528] sm:$0xff]
    %v310 = vld [vmem:[#allocation2 + $0x530] sm:$0xff]
    %v311 = vld [vmem:[#allocation2 + $0x538] sm:$0xff]
    %v312 = vld [vmem:[#allocation2 + $0x540] sm:$0xff]
    %v313 = vld [vmem:[#allocation2 + $0x548] sm:$0xff]
    %v314 = vld [vmem:[#allocation2 + $0x550] sm:$0xff]
    %v315 = vld [vmem:[#allocation2 + $0x558] sm:$0xff]
    %v316 = vld [vmem:[#allocation2 + $0x560] sm:$0xff]
    %v317 = vld [vmem:[#allocation2 + $0x568] sm:$0xff]
    %v318 = vld [vmem:[#allocation2 + $0x570] sm:$0xff]
    %v319 = vld [vmem:[#allocation2 + $0x578] sm:$0xff]
    %v320 = vld [vmem:[#allocation2 + $0x580] sm:$0xff]
    %v321 = vld [vmem:[#allocation2 + $0x588] sm:$0xff]
    %v322 = vld [vmem:[#allocation2 + $0x590] sm:$0xff]
    %v323 = vld [vmem:[#allocation2 + $0x598] sm:$0xff]
    %v324 = vld [vmem:[#allocation2 + $0x5a0] sm:$0xff]
    %v325 = vld [vmem:[#allocation2 + $0x5a8] sm:$0xff]
    %v326 = vld [vmem:[#allocation2 + $0x5b0] sm:$0xff]
    %v327 = vld [vmem:[#allocation2 + $0x5b8] sm:$0xff]
    %v328 = vld [vmem:[#allocation2 + $0x5c0] sm:$0xff]
    %v329 = vld [vmem:[#allocation2 + $0x5c8] sm:$0xff]
    %v330 = vld [vmem:[#allocation2 + $0x5d0] sm:$0xff]
    %v331 = vld [vmem:[#allocation2 + $0x5d8] sm:$0xff]
    %v332 = vld [vmem:[#allocation2 + $0x5e0] sm:$0xff]
    %v333 = vld [vmem:[#allocation2 + $0x5e8] sm:$0xff]
    %v334 = vld [vmem:[#allocation2 + $0x5f0] sm:$0xff]
    %v335 = vld [vmem:[#allocation2 + $0x5f8] sm:$0xff]
    %v336 = vld [vmem:[#allocation2 + $0x600] sm:$0xff]
    %v337 = vld [vmem:[#allocation2 + $0x608] sm:$0xff]
    %v338 = vld [vmem:[#allocation2 + $0x610] sm:$0xff]
    %v339 = vld [vmem:[#allocation2 + $0x618] sm:$0xff]
    %v340 = vld [vmem:[#allocation2 + $0x620] sm:$0xff]
    %v341 = vld [vmem:[#allocation2 + $0x628] sm:$0xff]
    %v342 = vld [vmem:[#allocation2 + $0x630] sm:$0xff]
    %v343 = vld [vmem:[#allocation2 + $0x638] sm:$0xff]
    %v344 = vld [vmem:[#allocation2 + $0x640] sm:$0xff]
    %v345 = vld [vmem:[#allocation2 + $0x648] sm:$0xff]
    %v346 = vld [vmem:[#allocation2 + $0x650] sm:$0xff]
    %v347 = vld [vmem:[#allocation2 + $0x658] sm:$0xff]
    %v348 = vld [vmem:[#allocation2 + $0x660] sm:$0xff]
    %v349 = vld [vmem:[#allocation2 + $0x668] sm:$0xff]
    %v350 = vld [vmem:[#allocation2 + $0x670] sm:$0xff]
    %v351 = vld [vmem:[#allocation2 + $0x678] sm:$0xff]
    %v352 = vld [vmem:[#allocation2 + $0x680] sm:$0xff]
    %v353 = vld [vmem:[#allocation2 + $0x688] sm:$0xff]
    %v354 = vld [vmem:[#allocation2 + $0x690] sm:$0xff]
    %v355 = vld [vmem:[#allocation2 + $0x698] sm:$0xff]
    %v356 = vld [vmem:[#allocation2 + $0x6a0] sm:$0xff]
    %v357 = vld [vmem:[#allocation2 + $0x6a8] sm:$0xff]
    %v358 = vld [vmem:[#allocation2 + $0x6b0] sm:$0xff]
    %v359 = vld [vmem:[#allocation2 + $0x6b8] sm:$0xff]
    %v360 = vld [vmem:[#allocation2 + $0x6c0] sm:$0xff]
    %v361 = vld [vmem:[#allocation2 + $0x6c8] sm:$0xff]
    %v362 = vld [vmem:[#allocation2 + $0x6d0] sm:$0xff]
    %v363 = vld [vmem:[#allocation2 + $0x6d8] sm:$0xff]
    %v364 = vld [vmem:[#allocation2 + $0x6e0] sm:$0xff]
    %v365 = vld [vmem:[#allocation2 + $0x6e8] sm:$0xff]
    %v366 = vld [vmem:[#allocation2 + $0x6f0] sm:$0xff]
    %v367 = vld [vmem:[#allocation2 + $0x6f8] sm:$0xff]
    %v368 = vld [vmem:[#allocation2 + $0x700] sm:$0xff]
    %v369 = vld [vmem:[#allocation2 + $0x708] sm:$0xff]
    %v370 = vld [vmem:[#allocation2 + $0x710] sm:$0xff]
    %v371 = vld [vmem:[#allocation2 + $0x718] sm:$0xff]
    %v372 = vld [vmem:[#allocation2 + $0x720] sm:$0xff]
    %v373 = vld [vmem:[#allocation2 + $0x728] sm:$0xff]
    %v374 = vld [vmem:[#allocation2 + $0x730] sm:$0xff]
    %v375 = vld [vmem:[#allocation2 + $0x738] sm:$0xff]
    %v376 = vld [vmem:[#allocation2 + $0x740] sm:$0xff]
    %v377 = vld [vmem:[#allocation2 + $0x748] sm:$0xff]
    %v378 = vld [vmem:[#allocation2 + $0x750] sm:$0xff]
    %v379 = vld [vmem:[#allocation2 + $0x758] sm:$0xff]
    %v380 = vld [vmem:[#allocation2 + $0x760] sm:$0xff]
    %v381 = vld [vmem:[#allocation2 + $0x768] sm:$0xff]
    %v382 = vld [vmem:[#allocation2 + $0x770] sm:$0xff]
    %v383 = vld [vmem:[#allocation2 + $0x778] sm:$0xff]
    %v384 = vld [vmem:[#allocation2 + $0x780] sm:$0xff]
    %v385 = vld [vmem:[#allocation2 + $0x788] sm:$0xff]
    %v386 = vld [vmem:[#allocation2 + $0x790] sm:$0xff]
    %v387 = vld [vmem:[#allocation2 + $0x798] sm:$0xff]
    %v388 = vld [vmem:[#allocation2 + $0x7a0] sm:$0xff]
    %v389 = vld [vmem:[#allocation2 + $0x7a8] sm:$0xff]
    %v390 = vld [vmem:[#allocation2 + $0x7b0] sm:$0xff]
    %v391 = vld [vmem:[#allocation2 + $0x7b8] sm:$0xff]
    %v392 = vld [vmem:[#allocation2 + $0x7c0] sm:$0xff]
    %v393 = vld [vmem:[#allocation2 + $0x7c8] sm:$0xff]
    %v394 = vld [vmem:[#allocation2 + $0x7d0] sm:$0xff]
    %v395 = vld [vmem:[#allocation2 + $0x7d8] sm:$0xff]
    %v396 = vld [vmem:[#allocation2 + $0x7e0] sm:$0xff]
    %v397 = vld [vmem:[#allocation2 + $0x7e8] sm:$0xff]
    %v398 = vld [vmem:[#allocation2 + $0x7f0] sm:$0xff]
    %v399 = vld [vmem:[#allocation2 + $0x7f8] sm:$0xff]
    %v400 = vld [vmem:[%s3] sm:$0xf]
    %v402 = vperm.slane %v400, 0
    %v403 = vperm.slane %v400, 1
    %v404 = vperm.slane %v400, 2
    %v405 = vperm.slane %v400, 3
    %v666 = vunpack.c.l.b16 %v144
    %v667 = vunpack.c.h.b16 %v144
    %v668 = vunpack.c.l.b16 %v145
    %v669 = vunpack.c.h.b16 %v145
    %v670 = vunpack.c.l.b16 %v146
    %v671 = vunpack.c.h.b16 %v146
    %v672 = vunpack.c.l.b16 %v147
    %v673 = vunpack.c.h.b16 %v147
    %v674 = vunpack.c.l.b16 %v148
    %v675 = vunpack.c.h.b16 %v148
    %v676 = vunpack.c.l.b16 %v149
    %v677 = vunpack.c.h.b16 %v149
    %v678 = vunpack.c.l.b16 %v150
    %v679 = vunpack.c.h.b16 %v150
    %v680 = vunpack.c.l.b16 %v151
    %v681 = vunpack.c.h.b16 %v151
    %v682 = vunpack.c.l.b16 %v152
    %v683 = vunpack.c.h.b16 %v152
    %v684 = vunpack.c.l.b16 %v153
    %v685 = vunpack.c.h.b16 %v153
    %v686 = vunpack.c.l.b16 %v154
    %v687 = vunpack.c.h.b16 %v154
    %v688 = vunpack.c.l.b16 %v155
    %v689 = vunpack.c.h.b16 %v155
    %v690 = vunpack.c.l.b16 %v156
    %v691 = vunpack.c.h.b16 %v156
    %v692 = vunpack.c.l.b16 %v157
    %v693 = vunpack.c.h.b16 %v157
    %v694 = vunpack.c.l.b16 %v158
    %v695 = vunpack.c.h.b16 %v158
    %v696 = vunpack.c.l.b16 %v159
    %v697 = vunpack.c.h.b16 %v159
    %v698 = vunpack.c.l.b16 %v160
    %v699 = vunpack.c.h.b16 %v160
    %v700 = vunpack.c.l.b16 %v161
    %v701 = vunpack.c.h.b16 %v161
    %v702 = vunpack.c.l.b16 %v162
    %v703 = vunpack.c.h.b16 %v162
    %v704 = vunpack.c.l.b16 %v163
    %v705 = vunpack.c.h.b16 %v163
    %v706 = vunpack.c.l.b16 %v164
    %v707 = vunpack.c.h.b16 %v164
    %v708 = vunpack.c.l.b16 %v165
    %v709 = vunpack.c.h.b16 %v165
    %v710 = vunpack.c.l.b16 %v166
    %v711 = vunpack.c.h.b16 %v166
    %v712 = vunpack.c.l.b16 %v167
    %v713 = vunpack.c.h.b16 %v167
    %v714 = vunpack.c.l.b16 %v168
    %v715 = vunpack.c.h.b16 %v168
    %v716 = vunpack.c.l.b16 %v169
    %v717 = vunpack.c.h.b16 %v169
    %v718 = vunpack.c.l.b16 %v170
    %v719 = vunpack.c.h.b16 %v170
    %v720 = vunpack.c.l.b16 %v171
    %v721 = vunpack.c.h.b16 %v171
    %v722 = vunpack.c.l.b16 %v172
    %v723 = vunpack.c.h.b16 %v172
    %v724 = vunpack.c.l.b16 %v173
    %v725 = vunpack.c.h.b16 %v173
    %v726 = vunpack.c.l.b16 %v174
    %v727 = vunpack.c.h.b16 %v174
    %v728 = vunpack.c.l.b16 %v175
    %v729 = vunpack.c.h.b16 %v175
    %v730 = vunpack.c.l.b16 %v176
    %v731 = vunpack.c.h.b16 %v176
    %v732 = vunpack.c.l.b16 %v177
    %v733 = vunpack.c.h.b16 %v177
    %v734 = vunpack.c.l.b16 %v178
    %v735 = vunpack.c.h.b16 %v178
    %v736 = vunpack.c.l.b16 %v179
    %v737 = vunpack.c.h.b16 %v179
    %v738 = vunpack.c.l.b16 %v180
    %v739 = vunpack.c.h.b16 %v180
    %v740 = vunpack.c.l.b16 %v181
    %v741 = vunpack.c.h.b16 %v181
    %v742 = vunpack.c.l.b16 %v182
    %v743 = vunpack.c.h.b16 %v182
    %v744 = vunpack.c.l.b16 %v183
    %v745 = vunpack.c.h.b16 %v183
    %v746 = vunpack.c.l.b16 %v184
    %v747 = vunpack.c.h.b16 %v184
    %v748 = vunpack.c.l.b16 %v185
    %v749 = vunpack.c.h.b16 %v185
    %v750 = vunpack.c.l.b16 %v186
    %v751 = vunpack.c.h.b16 %v186
    %v752 = vunpack.c.l.b16 %v187
    %v753 = vunpack.c.h.b16 %v187
    %v754 = vunpack.c.l.b16 %v188
    %v755 = vunpack.c.h.b16 %v188
    %v756 = vunpack.c.l.b16 %v189
    %v757 = vunpack.c.h.b16 %v189
    %v758 = vunpack.c.l.b16 %v190
    %v759 = vunpack.c.h.b16 %v190
    %v760 = vunpack.c.l.b16 %v191
    %v761 = vunpack.c.h.b16 %v191
    %v762 = vunpack.c.l.b16 %v192
    %v763 = vunpack.c.h.b16 %v192
    %v764 = vunpack.c.l.b16 %v193
    %v765 = vunpack.c.h.b16 %v193
    %v766 = vunpack.c.l.b16 %v194
    %v767 = vunpack.c.h.b16 %v194
    %v768 = vunpack.c.l.b16 %v195
    %v769 = vunpack.c.h.b16 %v195
    %v770 = vunpack.c.l.b16 %v196
    %v771 = vunpack.c.h.b16 %v196
    %v772 = vunpack.c.l.b16 %v197
    %v773 = vunpack.c.h.b16 %v197
    %v774 = vunpack.c.l.b16 %v198
    %v775 = vunpack.c.h.b16 %v198
    %v776 = vunpack.c.l.b16 %v199
    %v777 = vunpack.c.h.b16 %v199
    %v778 = vunpack.c.l.b16 %v200
    %v779 = vunpack.c.h.b16 %v200
    %v780 = vunpack.c.l.b16 %v201
    %v781 = vunpack.c.h.b16 %v201
    %v782 = vunpack.c.l.b16 %v202
    %v783 = vunpack.c.h.b16 %v202
    %v784 = vunpack.c.l.b16 %v203
    %v785 = vunpack.c.h.b16 %v203
    %v786 = vunpack.c.l.b16 %v204
    %v787 = vunpack.c.h.b16 %v204
    %v788 = vunpack.c.l.b16 %v205
    %v789 = vunpack.c.h.b16 %v205
    %v790 = vunpack.c.l.b16 %v206
    %v791 = vunpack.c.h.b16 %v206
    %v792 = vunpack.c.l.b16 %v207
    %v793 = vunpack.c.h.b16 %v207
    %v794 = vunpack.c.l.b16 %v208
    %v795 = vunpack.c.h.b16 %v208
    %v796 = vunpack.c.l.b16 %v209
    %v797 = vunpack.c.h.b16 %v209
    %v798 = vunpack.c.l.b16 %v210
    %v799 = vunpack.c.h.b16 %v210
    %v800 = vunpack.c.l.b16 %v211
    %v801 = vunpack.c.h.b16 %v211
    %v802 = vunpack.c.l.b16 %v212
    %v803 = vunpack.c.h.b16 %v212
    %v804 = vunpack.c.l.b16 %v213
    %v805 = vunpack.c.h.b16 %v213
    %v806 = vunpack.c.l.b16 %v214
    %v807 = vunpack.c.h.b16 %v214
    %v808 = vunpack.c.l.b16 %v215
    %v809 = vunpack.c.h.b16 %v215
    %v810 = vunpack.c.l.b16 %v216
    %v811 = vunpack.c.h.b16 %v216
    %v812 = vunpack.c.l.b16 %v217
    %v813 = vunpack.c.h.b16 %v217
    %v814 = vunpack.c.l.b16 %v218
    %v815 = vunpack.c.h.b16 %v218
    %v816 = vunpack.c.l.b16 %v219
    %v817 = vunpack.c.h.b16 %v219
    %v818 = vunpack.c.l.b16 %v220
    %v819 = vunpack.c.h.b16 %v220
    %v820 = vunpack.c.l.b16 %v221
    %v821 = vunpack.c.h.b16 %v221
    %v822 = vunpack.c.l.b16 %v222
    %v823 = vunpack.c.h.b16 %v222
    %v824 = vunpack.c.l.b16 %v223
    %v825 = vunpack.c.h.b16 %v223
    %v826 = vunpack.c.l.b16 %v224
    %v827 = vunpack.c.h.b16 %v224
    %v828 = vunpack.c.l.b16 %v225
    %v829 = vunpack.c.h.b16 %v225
    %v830 = vunpack.c.l.b16 %v226
    %v831 = vunpack.c.h.b16 %v226
    %v832 = vunpack.c.l.b16 %v227
    %v833 = vunpack.c.h.b16 %v227
    %v834 = vunpack.c.l.b16 %v228
    %v835 = vunpack.c.h.b16 %v228
    %v836 = vunpack.c.l.b16 %v229
    %v837 = vunpack.c.h.b16 %v229
    %v838 = vunpack.c.l.b16 %v230
    %v839 = vunpack.c.h.b16 %v230
    %v840 = vunpack.c.l.b16 %v231
    %v841 = vunpack.c.h.b16 %v231
    %v842 = vunpack.c.l.b16 %v232
    %v843 = vunpack.c.h.b16 %v232
    %v844 = vunpack.c.l.b16 %v233
    %v845 = vunpack.c.h.b16 %v233
    %v846 = vunpack.c.l.b16 %v234
    %v847 = vunpack.c.h.b16 %v234
    %v848 = vunpack.c.l.b16 %v235
    %v849 = vunpack.c.h.b16 %v235
    %v850 = vunpack.c.l.b16 %v236
    %v851 = vunpack.c.h.b16 %v236
    %v852 = vunpack.c.l.b16 %v237
    %v853 = vunpack.c.h.b16 %v237
    %v854 = vunpack.c.l.b16 %v238
    %v855 = vunpack.c.h.b16 %v238
    %v856 = vunpack.c.l.b16 %v239
    %v857 = vunpack.c.h.b16 %v239
    %v858 = vunpack.c.l.b16 %v240
    %v859 = vunpack.c.h.b16 %v240
    %v860 = vunpack.c.l.b16 %v241
    %v861 = vunpack.c.h.b16 %v241
    %v862 = vunpack.c.l.b16 %v242
    %v863 = vunpack.c.h.b16 %v242
    %v864 = vunpack.c.l.b16 %v243
    %v865 = vunpack.c.h.b16 %v243
    %v866 = vunpack.c.l.b16 %v244
    %v867 = vunpack.c.h.b16 %v244
    %v868 = vunpack.c.l.b16 %v245
    %v869 = vunpack.c.h.b16 %v245
    %v870 = vunpack.c.l.b16 %v246
    %v871 = vunpack.c.h.b16 %v246
    %v872 = vunpack.c.l.b16 %v247
    %v873 = vunpack.c.h.b16 %v247
    %v874 = vunpack.c.l.b16 %v248
    %v875 = vunpack.c.h.b16 %v248
    %v876 = vunpack.c.l.b16 %v249
    %v877 = vunpack.c.h.b16 %v249
    %v878 = vunpack.c.l.b16 %v250
    %v879 = vunpack.c.h.b16 %v250
    %v880 = vunpack.c.l.b16 %v251
    %v881 = vunpack.c.h.b16 %v251
    %v882 = vunpack.c.l.b16 %v252
    %v883 = vunpack.c.h.b16 %v252
    %v884 = vunpack.c.l.b16 %v253
    %v885 = vunpack.c.h.b16 %v253
    %v886 = vunpack.c.l.b16 %v254
    %v887 = vunpack.c.h.b16 %v254
    %v888 = vunpack.c.l.b16 %v255
    %v889 = vunpack.c.h.b16 %v255
    %v890 = vunpack.c.l.b16 %v256
    %v891 = vunpack.c.h.b16 %v256
    %v892 = vunpack.c.l.b16 %v257
    %v893 = vunpack.c.h.b16 %v257
    %v894 = vunpack.c.l.b16 %v258
    %v895 = vunpack.c.h.b16 %v258
    %v896 = vunpack.c.l.b16 %v259
    %v897 = vunpack.c.h.b16 %v259
    %v898 = vunpack.c.l.b16 %v260
    %v899 = vunpack.c.h.b16 %v260
    %v900 = vunpack.c.l.b16 %v261
    %v901 = vunpack.c.h.b16 %v261
    %v902 = vunpack.c.l.b16 %v262
    %v903 = vunpack.c.h.b16 %v262
    %v904 = vunpack.c.l.b16 %v263
    %v905 = vunpack.c.h.b16 %v263
    %v906 = vunpack.c.l.b16 %v264
    %v907 = vunpack.c.h.b16 %v264
    %v908 = vunpack.c.l.b16 %v265
    %v909 = vunpack.c.h.b16 %v265
    %v910 = vunpack.c.l.b16 %v266
    %v911 = vunpack.c.h.b16 %v266
    %v912 = vunpack.c.l.b16 %v267
    %v913 = vunpack.c.h.b16 %v267
    %v914 = vunpack.c.l.b16 %v268
    %v915 = vunpack.c.h.b16 %v268
    %v916 = vunpack.c.l.b16 %v269
    %v917 = vunpack.c.h.b16 %v269
    %v918 = vunpack.c.l.b16 %v270
    %v919 = vunpack.c.h.b16 %v270
    %v920 = vunpack.c.l.b16 %v271
    %v921 = vunpack.c.h.b16 %v271
    %v922 = vunpack.c.l.b16 %v272
    %v923 = vunpack.c.h.b16 %v272
    %v924 = vunpack.c.l.b16 %v273
    %v925 = vunpack.c.h.b16 %v273
    %v926 = vunpack.c.l.b16 %v274
    %v927 = vunpack.c.h.b16 %v274
    %v928 = vunpack.c.l.b16 %v275
    %v929 = vunpack.c.h.b16 %v275
    %v930 = vunpack.c.l.b16 %v276
    %v931 = vunpack.c.h.b16 %v276
    %v932 = vunpack.c.l.b16 %v277
    %v933 = vunpack.c.h.b16 %v277
    %v934 = vunpack.c.l.b16 %v278
    %v935 = vunpack.c.h.b16 %v278
    %v936 = vunpack.c.l.b16 %v279
    %v937 = vunpack.c.h.b16 %v279
    %v938 = vunpack.c.l.b16 %v280
    %v939 = vunpack.c.h.b16 %v280
    %v940 = vunpack.c.l.b16 %v281
    %v941 = vunpack.c.h.b16 %v281
    %v942 = vunpack.c.l.b16 %v282
    %v943 = vunpack.c.h.b16 %v282
    %v944 = vunpack.c.l.b16 %v283
    %v945 = vunpack.c.h.b16 %v283
    %v946 = vunpack.c.l.b16 %v284
    %v947 = vunpack.c.h.b16 %v284
    %v948 = vunpack.c.l.b16 %v285
    %v949 = vunpack.c.h.b16 %v285
    %v950 = vunpack.c.l.b16 %v286
    %v951 = vunpack.c.h.b16 %v286
    %v952 = vunpack.c.l.b16 %v287
    %v953 = vunpack.c.h.b16 %v287
    %v954 = vunpack.c.l.b16 %v288
    %v955 = vunpack.c.h.b16 %v288
    %v956 = vunpack.c.l.b16 %v289
    %v957 = vunpack.c.h.b16 %v289
    %v958 = vunpack.c.l.b16 %v290
    %v959 = vunpack.c.h.b16 %v290
    %v960 = vunpack.c.l.b16 %v291
    %v961 = vunpack.c.h.b16 %v291
    %v962 = vunpack.c.l.b16 %v292
    %v963 = vunpack.c.h.b16 %v292
    %v964 = vunpack.c.l.b16 %v293
    %v965 = vunpack.c.h.b16 %v293
    %v966 = vunpack.c.l.b16 %v294
    %v967 = vunpack.c.h.b16 %v294
    %v968 = vunpack.c.l.b16 %v295
    %v969 = vunpack.c.h.b16 %v295
    %v970 = vunpack.c.l.b16 %v296
    %v971 = vunpack.c.h.b16 %v296
    %v972 = vunpack.c.l.b16 %v297
    %v973 = vunpack.c.h.b16 %v297
    %v974 = vunpack.c.l.b16 %v298
    %v975 = vunpack.c.h.b16 %v298
    %v976 = vunpack.c.l.b16 %v299
    %v977 = vunpack.c.h.b16 %v299
    %v978 = vunpack.c.l.b16 %v300
    %v979 = vunpack.c.h.b16 %v300
    %v980 = vunpack.c.l.b16 %v301
    %v981 = vunpack.c.h.b16 %v301
    %v982 = vunpack.c.l.b16 %v302
    %v983 = vunpack.c.h.b16 %v302
    %v984 = vunpack.c.l.b16 %v303
    %v985 = vunpack.c.h.b16 %v303
    %v986 = vunpack.c.l.b16 %v304
    %v987 = vunpack.c.h.b16 %v304
    %v988 = vunpack.c.l.b16 %v305
    %v989 = vunpack.c.h.b16 %v305
    %v990 = vunpack.c.l.b16 %v306
    %v991 = vunpack.c.h.b16 %v306
    %v992 = vunpack.c.l.b16 %v307
    %v993 = vunpack.c.h.b16 %v307
    %v994 = vunpack.c.l.b16 %v308
    %v995 = vunpack.c.h.b16 %v308
    %v996 = vunpack.c.l.b16 %v309
    %v997 = vunpack.c.h.b16 %v309
    %v998 = vunpack.c.l.b16 %v310
    %v999 = vunpack.c.h.b16 %v310
    %v1000 = vunpack.c.l.b16 %v311
    %v1001 = vunpack.c.h.b16 %v311
    %v1002 = vunpack.c.l.b16 %v312
    %v1003 = vunpack.c.h.b16 %v312
    %v1004 = vunpack.c.l.b16 %v313
    %v1005 = vunpack.c.h.b16 %v313
    %v1006 = vunpack.c.l.b16 %v314
    %v1007 = vunpack.c.h.b16 %v314
    %v1008 = vunpack.c.l.b16 %v315
    %v1009 = vunpack.c.h.b16 %v315
    %v1010 = vunpack.c.l.b16 %v316
    %v1011 = vunpack.c.h.b16 %v316
    %v1012 = vunpack.c.l.b16 %v317
    %v1013 = vunpack.c.h.b16 %v317
    %v1014 = vunpack.c.l.b16 %v318
    %v1015 = vunpack.c.h.b16 %v318
    %v1016 = vunpack.c.l.b16 %v319
    %v1017 = vunpack.c.h.b16 %v319
    %v1018 = vunpack.c.l.b16 %v320
    %v1019 = vunpack.c.h.b16 %v320
    %v1020 = vunpack.c.l.b16 %v321
    %v1021 = vunpack.c.h.b16 %v321
    %v1022 = vunpack.c.l.b16 %v322
    %v1023 = vunpack.c.h.b16 %v322
    %v1024 = vunpack.c.l.b16 %v323
    %v1025 = vunpack.c.h.b16 %v323
    %v1026 = vunpack.c.l.b16 %v324
    %v1027 = vunpack.c.h.b16 %v324
    %v1028 = vunpack.c.l.b16 %v325
    %v1029 = vunpack.c.h.b16 %v325
    %v1030 = vunpack.c.l.b16 %v326
    %v1031 = vunpack.c.h.b16 %v326
    %v1032 = vunpack.c.l.b16 %v327
    %v1033 = vunpack.c.h.b16 %v327
    %v1034 = vunpack.c.l.b16 %v328
    %v1035 = vunpack.c.h.b16 %v328
    %v1036 = vunpack.c.l.b16 %v329
    %v1037 = vunpack.c.h.b16 %v329
    %v1038 = vunpack.c.l.b16 %v330
    %v1039 = vunpack.c.h.b16 %v330
    %v1040 = vunpack.c.l.b16 %v331
    %v1041 = vunpack.c.h.b16 %v331
    %v1042 = vunpack.c.l.b16 %v332
    %v1043 = vunpack.c.h.b16 %v332
    %v1044 = vunpack.c.l.b16 %v333
    %v1045 = vunpack.c.h.b16 %v333
    %v1046 = vunpack.c.l.b16 %v334
    %v1047 = vunpack.c.h.b16 %v334
    %v1048 = vunpack.c.l.b16 %v335
    %v1049 = vunpack.c.h.b16 %v335
    %v1050 = vunpack.c.l.b16 %v336
    %v1051 = vunpack.c.h.b16 %v336
    %v1052 = vunpack.c.l.b16 %v337
    %v1053 = vunpack.c.h.b16 %v337
    %v1054 = vunpack.c.l.b16 %v338
    %v1055 = vunpack.c.h.b16 %v338
    %v1056 = vunpack.c.l.b16 %v339
    %v1057 = vunpack.c.h.b16 %v339
    %v1058 = vunpack.c.l.b16 %v340
    %v1059 = vunpack.c.h.b16 %v340
    %v1060 = vunpack.c.l.b16 %v341
    %v1061 = vunpack.c.h.b16 %v341
    %v1062 = vunpack.c.l.b16 %v342
    %v1063 = vunpack.c.h.b16 %v342
    %v1064 = vunpack.c.l.b16 %v343
    %v1065 = vunpack.c.h.b16 %v343
    %v1066 = vunpack.c.l.b16 %v344
    %v1067 = vunpack.c.h.b16 %v344
    %v1068 = vunpack.c.l.b16 %v345
    %v1069 = vunpack.c.h.b16 %v345
    %v1070 = vunpack.c.l.b16 %v346
    %v1071 = vunpack.c.h.b16 %v346
    %v1072 = vunpack.c.l.b16 %v347
    %v1073 = vunpack.c.h.b16 %v347
    %v1074 = vunpack.c.l.b16 %v348
    %v1075 = vunpack.c.h.b16 %v348
    %v1076 = vunpack.c.l.b16 %v349
    %v1077 = vunpack.c.h.b16 %v349
    %v1078 = vunpack.c.l.b16 %v350
    %v1079 = vunpack.c.h.b16 %v350
    %v1080 = vunpack.c.l.b16 %v351
    %v1081 = vunpack.c.h.b16 %v351
    %v1082 = vunpack.c.l.b16 %v352
    %v1083 = vunpack.c.h.b16 %v352
    %v1084 = vunpack.c.l.b16 %v353
    %v1085 = vunpack.c.h.b16 %v353
    %v1086 = vunpack.c.l.b16 %v354
    %v1087 = vunpack.c.h.b16 %v354
    %v1088 = vunpack.c.l.b16 %v355
    %v1089 = vunpack.c.h.b16 %v355
    %v1090 = vunpack.c.l.b16 %v356
    %v1091 = vunpack.c.h.b16 %v356
    %v1092 = vunpack.c.l.b16 %v357
    %v1093 = vunpack.c.h.b16 %v357
    %v1094 = vunpack.c.l.b16 %v358
    %v1095 = vunpack.c.h.b16 %v358
    %v1096 = vunpack.c.l.b16 %v359
    %v1097 = vunpack.c.h.b16 %v359
    %v1098 = vunpack.c.l.b16 %v360
    %v1099 = vunpack.c.h.b16 %v360
    %v1100 = vunpack.c.l.b16 %v361
    %v1101 = vunpack.c.h.b16 %v361
    %v1102 = vunpack.c.l.b16 %v362
    %v1103 = vunpack.c.h.b16 %v362
    %v1104 = vunpack.c.l.b16 %v363
    %v1105 = vunpack.c.h.b16 %v363
    %v1106 = vunpack.c.l.b16 %v364
    %v1107 = vunpack.c.h.b16 %v364
    %v1108 = vunpack.c.l.b16 %v365
    %v1109 = vunpack.c.h.b16 %v365
    %v1110 = vunpack.c.l.b16 %v366
    %v1111 = vunpack.c.h.b16 %v366
    %v1112 = vunpack.c.l.b16 %v367
    %v1113 = vunpack.c.h.b16 %v367
    %v1114 = vunpack.c.l.b16 %v368
    %v1115 = vunpack.c.h.b16 %v368
    %v1116 = vunpack.c.l.b16 %v369
    %v1117 = vunpack.c.h.b16 %v369
    %v1118 = vunpack.c.l.b16 %v370
    %v1119 = vunpack.c.h.b16 %v370
    %v1120 = vunpack.c.l.b16 %v371
    %v1121 = vunpack.c.h.b16 %v371
    %v1122 = vunpack.c.l.b16 %v372
    %v1123 = vunpack.c.h.b16 %v372
    %v1124 = vunpack.c.l.b16 %v373
    %v1125 = vunpack.c.h.b16 %v373
    %v1126 = vunpack.c.l.b16 %v374
    %v1127 = vunpack.c.h.b16 %v374
    %v1128 = vunpack.c.l.b16 %v375
    %v1129 = vunpack.c.h.b16 %v375
    %v1130 = vunpack.c.l.b16 %v376
    %v1131 = vunpack.c.h.b16 %v376
    %v1132 = vunpack.c.l.b16 %v377
    %v1133 = vunpack.c.h.b16 %v377
    %v1134 = vunpack.c.l.b16 %v378
    %v1135 = vunpack.c.h.b16 %v378
    %v1136 = vunpack.c.l.b16 %v379
    %v1137 = vunpack.c.h.b16 %v379
    %v1138 = vunpack.c.l.b16 %v380
    %v1139 = vunpack.c.h.b16 %v380
    %v1140 = vunpack.c.l.b16 %v381
    %v1141 = vunpack.c.h.b16 %v381
    %v1142 = vunpack.c.l.b16 %v382
    %v1143 = vunpack.c.h.b16 %v382
    %v1144 = vunpack.c.l.b16 %v383
    %v1145 = vunpack.c.h.b16 %v383
    %v1146 = vunpack.c.l.b16 %v384
    %v1147 = vunpack.c.h.b16 %v384
    %v1148 = vunpack.c.l.b16 %v385
    %v1149 = vunpack.c.h.b16 %v385
    %v1150 = vunpack.c.l.b16 %v386
    %v1151 = vunpack.c.h.b16 %v386
    %v1152 = vunpack.c.l.b16 %v387
    %v1153 = vunpack.c.h.b16 %v387
    %v1154 = vunpack.c.l.b16 %v388
    %v1155 = vunpack.c.h.b16 %v388
    %v1156 = vunpack.c.l.b16 %v389
    %v1157 = vunpack.c.h.b16 %v389
    %v1158 = vunpack.c.l.b16 %v390
    %v1159 = vunpack.c.h.b16 %v390
    %v1160 = vunpack.c.l.b16 %v391
    %v1161 = vunpack.c.h.b16 %v391
    %v1162 = vunpack.c.l.b16 %v392
    %v1163 = vunpack.c.h.b16 %v392
    %v1164 = vunpack.c.l.b16 %v393
    %v1165 = vunpack.c.h.b16 %v393
    %v1166 = vunpack.c.l.b16 %v394
    %v1167 = vunpack.c.h.b16 %v394
    %v1168 = vunpack.c.l.b16 %v395
    %v1169 = vunpack.c.h.b16 %v395
    %v1170 = vunpack.c.l.b16 %v396
    %v1171 = vunpack.c.h.b16 %v396
    %v1172 = vunpack.c.l.b16 %v397
    %v1173 = vunpack.c.h.b16 %v397
    %v1174 = vunpack.c.l.b16 %v398
    %v1175 = vunpack.c.h.b16 %v398
    %v1176 = vunpack.c.l.b16 %v399
    %v1177 = vunpack.c.h.b16 %v399
    %v1178 = vpack.c.b16 %v670, %v666
    %v1179 = vpack.c.b16 %v671, %v667
    %v1180 = vpack.c.b16 %v672, %v668
    %v1181 = vpack.c.b16 %v673, %v669
    %v1182 = vpack.c.b16 %v678, %v674
    %v1183 = vpack.c.b16 %v679, %v675
    %v1184 = vpack.c.b16 %v680, %v676
    %v1185 = vpack.c.b16 %v681, %v677
    %v1186 = vpack.c.b16 %v686, %v682
    %v1187 = vpack.c.b16 %v687, %v683
    %v1188 = vpack.c.b16 %v688, %v684
    %v1189 = vpack.c.b16 %v689, %v685
    %v1190 = vpack.c.b16 %v694, %v690
    %v1191 = vpack.c.b16 %v695, %v691
    %v1192 = vpack.c.b16 %v696, %v692
    %v1193 = vpack.c.b16 %v697, %v693
    %v1194 = vpack.c.b16 %v702, %v698
    %v1195 = vpack.c.b16 %v703, %v699
    %v1196 = vpack.c.b16 %v704, %v700
    %v1197 = vpack.c.b16 %v705, %v701
    %v1198 = vpack.c.b16 %v710, %v706
    %v1199 = vpack.c.b16 %v711, %v707
    %v1200 = vpack.c.b16 %v712, %v708
    %v1201 = vpack.c.b16 %v713, %v709
    %v1202 = vpack.c.b16 %v718, %v714
    %v1203 = vpack.c.b16 %v719, %v715
    %v1204 = vpack.c.b16 %v720, %v716
    %v1205 = vpack.c.b16 %v721, %v717
    %v1206 = vpack.c.b16 %v726, %v722
    %v1207 = vpack.c.b16 %v727, %v723
    %v1208 = vpack.c.b16 %v728, %v724
    %v1209 = vpack.c.b16 %v729, %v725
    %v1210 = vpack.c.b16 %v734, %v730
    %v1211 = vpack.c.b16 %v735, %v731
    %v1212 = vpack.c.b16 %v736, %v732
    %v1213 = vpack.c.b16 %v737, %v733
    %v1214 = vpack.c.b16 %v742, %v738
    %v1215 = vpack.c.b16 %v743, %v739
    %v1216 = vpack.c.b16 %v744, %v740
    %v1217 = vpack.c.b16 %v745, %v741
    %v1218 = vpack.c.b16 %v750, %v746
    %v1219 = vpack.c.b16 %v751, %v747
    %v1220 = vpack.c.b16 %v752, %v748
    %v1221 = vpack.c.b16 %v753, %v749
    %v1222 = vpack.c.b16 %v758, %v754
    %v1223 = vpack.c.b16 %v759, %v755
    %v1224 = vpack.c.b16 %v760, %v756
    %v1225 = vpack.c.b16 %v761, %v757
    %v1226 = vpack.c.b16 %v766, %v762
    %v1227 = vpack.c.b16 %v767, %v763
    %v1228 = vpack.c.b16 %v768, %v764
    %v1229 = vpack.c.b16 %v769, %v765
    %v1230 = vpack.c.b16 %v774, %v770
    %v1231 = vpack.c.b16 %v775, %v771
    %v1232 = vpack.c.b16 %v776, %v772
    %v1233 = vpack.c.b16 %v777, %v773
    %v1234 = vpack.c.b16 %v782, %v778
    %v1235 = vpack.c.b16 %v783, %v779
    %v1236 = vpack.c.b16 %v784, %v780
    %v1237 = vpack.c.b16 %v785, %v781
    %v1238 = vpack.c.b16 %v790, %v786
    %v1239 = vpack.c.b16 %v791, %v787
    %v1240 = vpack.c.b16 %v792, %v788
    %v1241 = vpack.c.b16 %v793, %v789
    %v1242 = vpack.c.b16 %v798, %v794
    %v1243 = vpack.c.b16 %v799, %v795
    %v1244 = vpack.c.b16 %v800, %v796
    %v1245 = vpack.c.b16 %v801, %v797
    %v1246 = vpack.c.b16 %v806, %v802
    %v1247 = vpack.c.b16 %v807, %v803
    %v1248 = vpack.c.b16 %v808, %v804
    %v1249 = vpack.c.b16 %v809, %v805
    %v1250 = vpack.c.b16 %v814, %v810
    %v1251 = vpack.c.b16 %v815, %v811
    %v1252 = vpack.c.b16 %v816, %v812
    %v1253 = vpack.c.b16 %v817, %v813
    %v1254 = vpack.c.b16 %v822, %v818
    %v1255 = vpack.c.b16 %v823, %v819
    %v1256 = vpack.c.b16 %v824, %v820
    %v1257 = vpack.c.b16 %v825, %v821
    %v1258 = vpack.c.b16 %v830, %v826
    %v1259 = vpack.c.b16 %v831, %v827
    %v1260 = vpack.c.b16 %v832, %v828
    %v1261 = vpack.c.b16 %v833, %v829
    %v1262 = vpack.c.b16 %v838, %v834
    %v1263 = vpack.c.b16 %v839, %v835
    %v1264 = vpack.c.b16 %v840, %v836
    %v1265 = vpack.c.b16 %v841, %v837
    %v1266 = vpack.c.b16 %v846, %v842
    %v1267 = vpack.c.b16 %v847, %v843
    %v1268 = vpack.c.b16 %v848, %v844
    %v1269 = vpack.c.b16 %v849, %v845
    %v1270 = vpack.c.b16 %v854, %v850
    %v1271 = vpack.c.b16 %v855, %v851
    %v1272 = vpack.c.b16 %v856, %v852
    %v1273 = vpack.c.b16 %v857, %v853
    %v1274 = vpack.c.b16 %v862, %v858
    %v1275 = vpack.c.b16 %v863, %v859
    %v1276 = vpack.c.b16 %v864, %v860
    %v1277 = vpack.c.b16 %v865, %v861
    %v1278 = vpack.c.b16 %v870, %v866
    %v1279 = vpack.c.b16 %v871, %v867
    %v1280 = vpack.c.b16 %v872, %v868
    %v1281 = vpack.c.b16 %v873, %v869
    %v1282 = vpack.c.b16 %v878, %v874
    %v1283 = vpack.c.b16 %v879, %v875
    %v1284 = vpack.c.b16 %v880, %v876
    %v1285 = vpack.c.b16 %v881, %v877
    %v1286 = vpack.c.b16 %v886, %v882
    %v1287 = vpack.c.b16 %v887, %v883
    %v1288 = vpack.c.b16 %v888, %v884
    %v1289 = vpack.c.b16 %v889, %v885
    %v1290 = vpack.c.b16 %v894, %v890
    %v1291 = vpack.c.b16 %v895, %v891
    %v1292 = vpack.c.b16 %v896, %v892
    %v1293 = vpack.c.b16 %v897, %v893
    %v1294 = vpack.c.b16 %v902, %v898
    %v1295 = vpack.c.b16 %v903, %v899
    %v1296 = vpack.c.b16 %v904, %v900
    %v1297 = vpack.c.b16 %v905, %v901
    %v1298 = vpack.c.b16 %v910, %v906
    %v1299 = vpack.c.b16 %v911, %v907
    %v1300 = vpack.c.b16 %v912, %v908
    %v1301 = vpack.c.b16 %v913, %v909
    %v1302 = vpack.c.b16 %v918, %v914
    %v1303 = vpack.c.b16 %v919, %v915
    %v1304 = vpack.c.b16 %v920, %v916
    %v1305 = vpack.c.b16 %v921, %v917
    %v1306 = vpack.c.b16 %v926, %v922
    %v1307 = vpack.c.b16 %v927, %v923
    %v1308 = vpack.c.b16 %v928, %v924
    %v1309 = vpack.c.b16 %v929, %v925
    %v1310 = vpack.c.b16 %v934, %v930
    %v1311 = vpack.c.b16 %v935, %v931
    %v1312 = vpack.c.b16 %v936, %v932
    %v1313 = vpack.c.b16 %v937, %v933
    %v1314 = vpack.c.b16 %v942, %v938
    %v1315 = vpack.c.b16 %v943, %v939
    %v1316 = vpack.c.b16 %v944, %v940
    %v1317 = vpack.c.b16 %v945, %v941
    %v1318 = vpack.c.b16 %v950, %v946
    %v1319 = vpack.c.b16 %v951, %v947
    %v1320 = vpack.c.b16 %v952, %v948
    %v1321 = vpack.c.b16 %v953, %v949
    %v1322 = vpack.c.b16 %v958, %v954
    %v1323 = vpack.c.b16 %v959, %v955
    %v1324 = vpack.c.b16 %v960, %v956
    %v1325 = vpack.c.b16 %v961, %v957
    %v1326 = vpack.c.b16 %v966, %v962
    %v1327 = vpack.c.b16 %v967, %v963
    %v1328 = vpack.c.b16 %v968, %v964
    %v1329 = vpack.c.b16 %v969, %v965
    %v1330 = vpack.c.b16 %v974, %v970
    %v1331 = vpack.c.b16 %v975, %v971
    %v1332 = vpack.c.b16 %v976, %v972
    %v1333 = vpack.c.b16 %v977, %v973
    %v1334 = vpack.c.b16 %v982, %v978
    %v1335 = vpack.c.b16 %v983, %v979
    %v1336 = vpack.c.b16 %v984, %v980
    %v1337 = vpack.c.b16 %v985, %v981
    %v1338 = vpack.c.b16 %v990, %v986
    %v1339 = vpack.c.b16 %v991, %v987
    %v1340 = vpack.c.b16 %v992, %v988
    %v1341 = vpack.c.b16 %v993, %v989
    %v1342 = vpack.c.b16 %v998, %v994
    %v1343 = vpack.c.b16 %v999, %v995
    %v1344 = vpack.c.b16 %v1000, %v996
    %v1345 = vpack.c.b16 %v1001, %v997
    %v1346 = vpack.c.b16 %v1006, %v1002
    %v1347 = vpack.c.b16 %v1007, %v1003
    %v1348 = vpack.c.b16 %v1008, %v1004
    %v1349 = vpack.c.b16 %v1009, %v1005
    %v1350 = vpack.c.b16 %v1014, %v1010
    %v1351 = vpack.c.b16 %v1015, %v1011
    %v1352 = vpack.c.b16 %v1016, %v1012
    %v1353 = vpack.c.b16 %v1017, %v1013
    %v1354 = vpack.c.b16 %v1022, %v1018
    %v1355 = vpack.c.b16 %v1023, %v1019
    %v1356 = vpack.c.b16 %v1024, %v1020
    %v1357 = vpack.c.b16 %v1025, %v1021
    %v1358 = vpack.c.b16 %v1030, %v1026
    %v1359 = vpack.c.b16 %v1031, %v1027
    %v1360 = vpack.c.b16 %v1032, %v1028
    %v1361 = vpack.c.b16 %v1033, %v1029
    %v1362 = vpack.c.b16 %v1038, %v1034
    %v1363 = vpack.c.b16 %v1039, %v1035
    %v1364 = vpack.c.b16 %v1040, %v1036
    %v1365 = vpack.c.b16 %v1041, %v1037
    %v1366 = vpack.c.b16 %v1046, %v1042
    %v1367 = vpack.c.b16 %v1047, %v1043
    %v1368 = vpack.c.b16 %v1048, %v1044
    %v1369 = vpack.c.b16 %v1049, %v1045
    %v1370 = vpack.c.b16 %v1054, %v1050
    %v1371 = vpack.c.b16 %v1055, %v1051
    %v1372 = vpack.c.b16 %v1056, %v1052
    %v1373 = vpack.c.b16 %v1057, %v1053
    %v1374 = vpack.c.b16 %v1062, %v1058
    %v1375 = vpack.c.b16 %v1063, %v1059
    %v1376 = vpack.c.b16 %v1064, %v1060
    %v1377 = vpack.c.b16 %v1065, %v1061
    %v1378 = vpack.c.b16 %v1070, %v1066
    %v1379 = vpack.c.b16 %v1071, %v1067
    %v1380 = vpack.c.b16 %v1072, %v1068
    %v1381 = vpack.c.b16 %v1073, %v1069
    %v1382 = vpack.c.b16 %v1078, %v1074
    %v1383 = vpack.c.b16 %v1079, %v1075
    %v1384 = vpack.c.b16 %v1080, %v1076
    %v1385 = vpack.c.b16 %v1081, %v1077
    %v1386 = vpack.c.b16 %v1086, %v1082
    %v1387 = vpack.c.b16 %v1087, %v1083
    %v1388 = vpack.c.b16 %v1088, %v1084
    %v1389 = vpack.c.b16 %v1089, %v1085
    %v1390 = vpack.c.b16 %v1094, %v1090
    %v1391 = vpack.c.b16 %v1095, %v1091
    %v1392 = vpack.c.b16 %v1096, %v1092
    %v1393 = vpack.c.b16 %v1097, %v1093
    %v1394 = vpack.c.b16 %v1102, %v1098
    %v1395 = vpack.c.b16 %v1103, %v1099
    %v1396 = vpack.c.b16 %v1104, %v1100
    %v1397 = vpack.c.b16 %v1105, %v1101
    %v1398 = vpack.c.b16 %v1110, %v1106
    %v1399 = vpack.c.b16 %v1111, %v1107
    %v1400 = vpack.c.b16 %v1112, %v1108
    %v1401 = vpack.c.b16 %v1113, %v1109
    %v1402 = vpack.c.b16 %v1118, %v1114
    %v1403 = vpack.c.b16 %v1119, %v1115
    %v1404 = vpack.c.b16 %v1120, %v1116
    %v1405 = vpack.c.b16 %v1121, %v1117
    %v1406 = vpack.c.b16 %v1126, %v1122
    %v1407 = vpack.c.b16 %v1127, %v1123
    %v1408 = vpack.c.b16 %v1128, %v1124
    %v1409 = vpack.c.b16 %v1129, %v1125
    %v1410 = vpack.c.b16 %v1134, %v1130
    %v1411 = vpack.c.b16 %v1135, %v1131
    %v1412 = vpack.c.b16 %v1136, %v1132
    %v1413 = vpack.c.b16 %v1137, %v1133
    %v1414 = vpack.c.b16 %v1142, %v1138
    %v1415 = vpack.c.b16 %v1143, %v1139
    %v1416 = vpack.c.b16 %v1144, %v1140
    %v1417 = vpack.c.b16 %v1145, %v1141
    %v1418 = vpack.c.b16 %v1150, %v1146
    %v1419 = vpack.c.b16 %v1151, %v1147
    %v1420 = vpack.c.b16 %v1152, %v1148
    %v1421 = vpack.c.b16 %v1153, %v1149
    %v1422 = vpack.c.b16 %v1158, %v1154
    %v1423 = vpack.c.b16 %v1159, %v1155
    %v1424 = vpack.c.b16 %v1160, %v1156
    %v1425 = vpack.c.b16 %v1161, %v1157
    %v1426 = vpack.c.b16 %v1166, %v1162
    %v1427 = vpack.c.b16 %v1167, %v1163
    %v1428 = vpack.c.b16 %v1168, %v1164
    %v1429 = vpack.c.b16 %v1169, %v1165
    %v1430 = vpack.c.b16 %v1174, %v1170
    %v1431 = vpack.c.b16 %v1175, %v1171
    %v1432 = vpack.c.b16 %v1176, %v1172
    %v1433 = vpack.c.b16 %v1177, %v1173
    %1690 = vmatpush.bf16.msra.mxu0 %v1206
    %1691 = vmatpush.bf16.msra.mxu0 %v1202
    %1692 = vmatpush.bf16.msra.mxu0 %v1198
    %1693 = vmatpush.bf16.msra.mxu0 %v1194
    %1694 = vmatpush.bf16.msra.mxu0 %v1190
    %1695 = vmatpush.bf16.msra.mxu0 %v1186
    %1696 = vmatpush.bf16.msra.mxu0 %v1182
    %1697 = vmatpush.bf16.msra.mxu0 %v1178
    %1698 = vmatmul.bf16.gmra.mxu0 %v134
    %v1699 = vpop.f32.mrf.mxu0
    %v1700 = vadd.f32 %v402, %v1699
    %v1701 = vpop.f32.mrf.mxu0
    %1702 = vdwg.mxu0
    %1703 = vmatpush.bf16.msra.mxu0 %v1238
    %1704 = vmatpush.bf16.msra.mxu0 %v1234
    %1705 = vmatpush.bf16.msra.mxu0 %v1230
    %1706 = vmatpush.bf16.msra.mxu0 %v1226
    %1707 = vmatpush.bf16.msra.mxu0 %v1222
    %1708 = vmatpush.bf16.msra.mxu0 %v1218
    %1709 = vmatpush.bf16.msra.mxu0 %v1214
    %1710 = vmatpush.bf16.msra.mxu0 %v1210
    %1711 = vmatmul.bf16.gmra.mxu0 %v135
    %v1712 = vpop.f32.mrf.mxu0
    %v1713 = vadd.f32 %v1700, %v1712
    %v1714 = vpop.f32.mrf.mxu0
    %1715 = vdwg.mxu0
    %1716 = vmatpush.bf16.msra.mxu0 %v1270
    %1717 = vmatpush.bf16.msra.mxu0 %v1266
    %1718 = vmatpush.bf16.msra.mxu0 %v1262
    %1719 = vmatpush.bf16.msra.mxu0 %v1258
    %1720 = vmatpush.bf16.msra.mxu0 %v1254
    %1721 = vmatpush.bf16.msra.mxu0 %v1250
    %1722 = vmatpush.bf16.msra.mxu0 %v1246
    %1723 = vmatpush.bf16.msra.mxu0 %v1242
    %1724 = vmatmul.bf16.gmra.mxu0 %v136
    %v1725 = vpop.f32.mrf.mxu0
    %v1726 = vadd.f32 %v1713, %v1725
    %v1727 = vpop.f32.mrf.mxu0
    %1728 = vdwg.mxu0
    %1729 = vmatpush.bf16.msra.mxu0 %v1302
    %1730 = vmatpush.bf16.msra.mxu0 %v1298
    %1731 = vmatpush.bf16.msra.mxu0 %v1294
    %1732 = vmatpush.bf16.msra.mxu0 %v1290
    %1733 = vmatpush.bf16.msra.mxu0 %v1286
    %1734 = vmatpush.bf16.msra.mxu0 %v1282
    %1735 = vmatpush.bf16.msra.mxu0 %v1278
    %1736 = vmatpush.bf16.msra.mxu0 %v1274
    %1737 = vmatmul.bf16.gmra.mxu0 %v137
    %v1738 = vpop.f32.mrf.mxu0
    %v1739 = vadd.f32 %v1726, %v1738
    %v1740 = vpop.f32.mrf.mxu0
    %1741 = vdwg.mxu0
    %1742 = vmatpush.bf16.msra.mxu0 %v1334
    %1743 = vmatpush.bf16.msra.mxu0 %v1330
    %1744 = vmatpush.bf16.msra.mxu0 %v1326
    %1745 = vmatpush.bf16.msra.mxu0 %v1322
    %1746 = vmatpush.bf16.msra.mxu0 %v1318
    %1747 = vmatpush.bf16.msra.mxu0 %v1314
    %1748 = vmatpush.bf16.msra.mxu0 %v1310
    %1749 = vmatpush.bf16.msra.mxu0 %v1306
    %1750 = vmatmul.bf16.gmra.mxu0 %v138
    %v1751 = vpop.f32.mrf.mxu0
    %v1752 = vadd.f32 %v1739, %v1751
    %v1753 = vpop.f32.mrf.mxu0
    %1754 = vdwg.mxu0
    %1755 = vmatpush.bf16.msra.mxu0 %v1366
    %1756 = vmatpush.bf16.msra.mxu0 %v1362
    %1757 = vmatpush.bf16.msra.mxu0 %v1358
    %1758 = vmatpush.bf16.msra.mxu0 %v1354
    %1759 = vmatpush.bf16.msra.mxu0 %v1350
    %1760 = vmatpush.bf16.msra.mxu0 %v1346
    %1761 = vmatpush.bf16.msra.mxu0 %v1342
    %1762 = vmatpush.bf16.msra.mxu0 %v1338
    %1763 = vmatmul.bf16.gmra.mxu0 %v139
    %v1764 = vpop.f32.mrf.mxu0
    %v1765 = vadd.f32 %v1752, %v1764
    %v1766 = vpop.f32.mrf.mxu0
    %1767 = vdwg.mxu0
    %1768 = vmatpush.bf16.msra.mxu0 %v1398
    %1769 = vmatpush.bf16.msra.mxu0 %v1394
    %1770 = vmatpush.bf16.msra.mxu0 %v1390
    %1771 = vmatpush.bf16.msra.mxu0 %v1386
    %1772 = vmatpush.bf16.msra.mxu0 %v1382
    %1773 = vmatpush.bf16.msra.mxu0 %v1378
    %1774 = vmatpush.bf16.msra.mxu0 %v1374
    %1775 = vmatpush.bf16.msra.mxu0 %v1370
    %1776 = vmatmul.bf16.gmra.mxu0 %v140
    %v1777 = vpop.f32.mrf.mxu0
    %v1778 = vadd.f32 %v1765, %v1777
    %v1779 = vpop.f32.mrf.mxu0
    %1780 = vdwg.mxu0
    %1781 = vmatpush.bf16.msra.mxu0 %v1430
    %1782 = vmatpush.bf16.msra.mxu0 %v1426
    %1783 = vmatpush.bf16.msra.mxu0 %v1422
    %1784 = vmatpush.bf16.msra.mxu0 %v1418
    %1785 = vmatpush.bf16.msra.mxu0 %v1414
    %1786 = vmatpush.bf16.msra.mxu0 %v1410
    %1787 = vmatpush.bf16.msra.mxu0 %v1406
    %1788 = vmatpush.bf16.msra.mxu0 %v1402
    %1789 = vmatmul.bf16.gmra.mxu0 %v141
    %v1790 = vpop.f32.mrf.mxu0
    %v1791 = vadd.f32 %v1778, %v1790
    %v1792 = vpop.f32.mrf.mxu0
    %1793 = vdwg.mxu0
    %1794 = vmatpush.bf16.msra.mxu0 %v1207
    %1795 = vmatpush.bf16.msra.mxu0 %v1203
    %1796 = vmatpush.bf16.msra.mxu0 %v1199
    %1797 = vmatpush.bf16.msra.mxu0 %v1195
    %1798 = vmatpush.bf16.msra.mxu0 %v1191
    %1799 = vmatpush.bf16.msra.mxu0 %v1187
    %1800 = vmatpush.bf16.msra.mxu0 %v1183
    %1801 = vmatpush.bf16.msra.mxu0 %v1179
    %1802 = vmatmul.bf16.gmra.mxu0 %v134
    %v1803 = vpop.f32.mrf.mxu0
    %v1804 = vadd.f32 %v403, %v1803
    %v1805 = vpop.f32.mrf.mxu0
    %1806 = vdwg.mxu0
    %1807 = vmatpush.bf16.msra.mxu0 %v1239
    %1808 = vmatpush.bf16.msra.mxu0 %v1235
    %1809 = vmatpush.bf16.msra.mxu0 %v1231
    %1810 = vmatpush.bf16.msra.mxu0 %v1227
    %1811 = vmatpush.bf16.msra.mxu0 %v1223
    %1812 = vmatpush.bf16.msra.mxu0 %v1219
    %1813 = vmatpush.bf16.msra.mxu0 %v1215
    %1814 = vmatpush.bf16.msra.mxu0 %v1211
    %1815 = vmatmul.bf16.gmra.mxu0 %v135
    %v1816 = vpop.f32.mrf.mxu0
    %v1817 = vadd.f32 %v1804, %v1816
    %v1818 = vpop.f32.mrf.mxu0
    %1819 = vdwg.mxu0
    %1820 = vmatpush.bf16.msra.mxu0 %v1271
    %1821 = vmatpush.bf16.msra.mxu0 %v1267
    %1822 = vmatpush.bf16.msra.mxu0 %v1263
    %1823 = vmatpush.bf16.msra.mxu0 %v1259
    %1824 = vmatpush.bf16.msra.mxu0 %v1255
    %1825 = vmatpush.bf16.msra.mxu0 %v1251
    %1826 = vmatpush.bf16.msra.mxu0 %v1247
    %1827 = vmatpush.bf16.msra.mxu0 %v1243
    %1828 = vmatmul.bf16.gmra.mxu0 %v136
    %v1829 = vpop.f32.mrf.mxu0
    %v1830 = vadd.f32 %v1817, %v1829
    %v1831 = vpop.f32.mrf.mxu0
    %1832 = vdwg.mxu0
    %1833 = vmatpush.bf16.msra.mxu0 %v1303
    %1834 = vmatpush.bf16.msra.mxu0 %v1299
    %1835 = vmatpush.bf16.msra.mxu0 %v1295
    %1836 = vmatpush.bf16.msra.mxu0 %v1291
    %1837 = vmatpush.bf16.msra.mxu0 %v1287
    %1838 = vmatpush.bf16.msra.mxu0 %v1283
    %1839 = vmatpush.bf16.msra.mxu0 %v1279
    %1840 = vmatpush.bf16.msra.mxu0 %v1275
    %1841 = vmatmul.bf16.gmra.mxu0 %v137
    %v1842 = vpop.f32.mrf.mxu0
    %v1843 = vadd.f32 %v1830, %v1842
    %v1844 = vpop.f32.mrf.mxu0
    %1845 = vdwg.mxu0
    %1846 = vmatpush.bf16.msra.mxu0 %v1335
    %1847 = vmatpush.bf16.msra.mxu0 %v1331
    %1848 = vmatpush.bf16.msra.mxu0 %v1327
    %1849 = vmatpush.bf16.msra.mxu0 %v1323
    %1850 = vmatpush.bf16.msra.mxu0 %v1319
    %1851 = vmatpush.bf16.msra.mxu0 %v1315
    %1852 = vmatpush.bf16.msra.mxu0 %v1311
    %1853 = vmatpush.bf16.msra.mxu0 %v1307
    %1854 = vmatmul.bf16.gmra.mxu0 %v138
    %v1855 = vpop.f32.mrf.mxu0
    %v1856 = vadd.f32 %v1843, %v1855
    %v1857 = vpop.f32.mrf.mxu0
    %1858 = vdwg.mxu0
    %1859 = vmatpush.bf16.msra.mxu0 %v1367
    %1860 = vmatpush.bf16.msra.mxu0 %v1363
    %1861 = vmatpush.bf16.msra.mxu0 %v1359
    %1862 = vmatpush.bf16.msra.mxu0 %v1355
    %1863 = vmatpush.bf16.msra.mxu0 %v1351
    %1864 = vmatpush.bf16.msra.mxu0 %v1347
    %1865 = vmatpush.bf16.msra.mxu0 %v1343
    %1866 = vmatpush.bf16.msra.mxu0 %v1339
    %1867 = vmatmul.bf16.gmra.mxu0 %v139
    %v1868 = vpop.f32.mrf.mxu0
    %v1869 = vadd.f32 %v1856, %v1868
    %v1870 = vpop.f32.mrf.mxu0
    %1871 = vdwg.mxu0
    %1872 = vmatpush.bf16.msra.mxu0 %v1399
    %1873 = vmatpush.bf16.msra.mxu0 %v1395
    %1874 = vmatpush.bf16.msra.mxu0 %v1391
    %1875 = vmatpush.bf16.msra.mxu0 %v1387
    %1876 = vmatpush.bf16.msra.mxu0 %v1383
    %1877 = vmatpush.bf16.msra.mxu0 %v1379
    %1878 = vmatpush.bf16.msra.mxu0 %v1375
    %1879 = vmatpush.bf16.msra.mxu0 %v1371
    %1880 = vmatmul.bf16.gmra.mxu0 %v140
    %v1881 = vpop.f32.mrf.mxu0
    %v1882 = vadd.f32 %v1869, %v1881
    %v1883 = vpop.f32.mrf.mxu0
    %1884 = vdwg.mxu0
    %1885 = vmatpush.bf16.msra.mxu0 %v1431
    %1886 = vmatpush.bf16.msra.mxu0 %v1427
    %1887 = vmatpush.bf16.msra.mxu0 %v1423
    %1888 = vmatpush.bf16.msra.mxu0 %v1419
    %1889 = vmatpush.bf16.msra.mxu0 %v1415
    %1890 = vmatpush.bf16.msra.mxu0 %v1411
    %1891 = vmatpush.bf16.msra.mxu0 %v1407
    %1892 = vmatpush.bf16.msra.mxu0 %v1403
    %1893 = vmatmul.bf16.gmra.mxu0 %v141
    %v1894 = vpop.f32.mrf.mxu0
    %v1895 = vadd.f32 %v1882, %v1894
    %v1896 = vpop.f32.mrf.mxu0
    %1897 = vdwg.mxu0
    %1898 = vmatpush.bf16.msra.mxu0 %v1208
    %1899 = vmatpush.bf16.msra.mxu0 %v1204
    %1900 = vmatpush.bf16.msra.mxu0 %v1200
    %1901 = vmatpush.bf16.msra.mxu0 %v1196
    %1902 = vmatpush.bf16.msra.mxu0 %v1192
    %1903 = vmatpush.bf16.msra.mxu0 %v1188
    %1904 = vmatpush.bf16.msra.mxu0 %v1184
    %1905 = vmatpush.bf16.msra.mxu0 %v1180
    %1906 = vmatmul.bf16.gmra.mxu0 %v134
    %v1907 = vpop.f32.mrf.mxu0
    %v1908 = vadd.f32 %v404, %v1907
    %v1909 = vpop.f32.mrf.mxu0
    %1910 = vdwg.mxu0
    %1911 = vmatpush.bf16.msra.mxu0 %v1240
    %1912 = vmatpush.bf16.msra.mxu0 %v1236
    %1913 = vmatpush.bf16.msra.mxu0 %v1232
    %1914 = vmatpush.bf16.msra.mxu0 %v1228
    %1915 = vmatpush.bf16.msra.mxu0 %v1224
    %1916 = vmatpush.bf16.msra.mxu0 %v1220
    %1917 = vmatpush.bf16.msra.mxu0 %v1216
    %1918 = vmatpush.bf16.msra.mxu0 %v1212
    %1919 = vmatmul.bf16.gmra.mxu0 %v135
    %v1920 = vpop.f32.mrf.mxu0
    %v1921 = vadd.f32 %v1908, %v1920
    %v1922 = vpop.f32.mrf.mxu0
    %1923 = vdwg.mxu0
    %1924 = vmatpush.bf16.msra.mxu0 %v1272
    %1925 = vmatpush.bf16.msra.mxu0 %v1268
    %1926 = vmatpush.bf16.msra.mxu0 %v1264
    %1927 = vmatpush.bf16.msra.mxu0 %v1260
    %1928 = vmatpush.bf16.msra.mxu0 %v1256
    %1929 = vmatpush.bf16.msra.mxu0 %v1252
    %1930 = vmatpush.bf16.msra.mxu0 %v1248
    %1931 = vmatpush.bf16.msra.mxu0 %v1244
    %1932 = vmatmul.bf16.gmra.mxu0 %v136
    %v1933 = vpop.f32.mrf.mxu0
    %v1934 = vadd.f32 %v1921, %v1933
    %v1935 = vpop.f32.mrf.mxu0
    %1936 = vdwg.mxu0
    %1937 = vmatpush.bf16.msra.mxu0 %v1304
    %1938 = vmatpush.bf16.msra.mxu0 %v1300
    %1939 = vmatpush.bf16.msra.mxu0 %v1296
    %1940 = vmatpush.bf16.msra.mxu0 %v1292
    %1941 = vmatpush.bf16.msra.mxu0 %v1288
    %1942 = vmatpush.bf16.msra.mxu0 %v1284
    %1943 = vmatpush.bf16.msra.mxu0 %v1280
    %1944 = vmatpush.bf16.msra.mxu0 %v1276
    %1945 = vmatmul.bf16.gmra.mxu0 %v137
    %v1946 = vpop.f32.mrf.mxu0
    %v1947 = vadd.f32 %v1934, %v1946
    %v1948 = vpop.f32.mrf.mxu0
    %1949 = vdwg.mxu0
    %1950 = vmatpush.bf16.msra.mxu0 %v1336
    %1951 = vmatpush.bf16.msra.mxu0 %v1332
    %1952 = vmatpush.bf16.msra.mxu0 %v1328
    %1953 = vmatpush.bf16.msra.mxu0 %v1324
    %1954 = vmatpush.bf16.msra.mxu0 %v1320
    %1955 = vmatpush.bf16.msra.mxu0 %v1316
    %1956 = vmatpush.bf16.msra.mxu0 %v1312
    %1957 = vmatpush.bf16.msra.mxu0 %v1308
    %1958 = vmatmul.bf16.gmra.mxu0 %v138
    %v1959 = vpop.f32.mrf.mxu0
    %v1960 = vadd.f32 %v1947, %v1959
    %v1961 = vpop.f32.mrf.mxu0
    %1962 = vdwg.mxu0
    %1963 = vmatpush.bf16.msra.mxu0 %v1368
    %1964 = vmatpush.bf16.msra.mxu0 %v1364
    %1965 = vmatpush.bf16.msra.mxu0 %v1360
    %1966 = vmatpush.bf16.msra.mxu0 %v1356
    %1967 = vmatpush.bf16.msra.mxu0 %v1352
    %1968 = vmatpush.bf16.msra.mxu0 %v1348
    %1969 = vmatpush.bf16.msra.mxu0 %v1344
    %1970 = vmatpush.bf16.msra.mxu0 %v1340
    %1971 = vmatmul.bf16.gmra.mxu0 %v139
    %v1972 = vpop.f32.mrf.mxu0
    %v1973 = vadd.f32 %v1960, %v1972
    %v1974 = vpop.f32.mrf.mxu0
    %1975 = vdwg.mxu0
    %1976 = vmatpush.bf16.msra.mxu0 %v1400
    %1977 = vmatpush.bf16.msra.mxu0 %v1396
    %1978 = vmatpush.bf16.msra.mxu0 %v1392
    %1979 = vmatpush.bf16.msra.mxu0 %v1388
    %1980 = vmatpush.bf16.msra.mxu0 %v1384
    %1981 = vmatpush.bf16.msra.mxu0 %v1380
    %1982 = vmatpush.bf16.msra.mxu0 %v1376
    %1983 = vmatpush.bf16.msra.mxu0 %v1372
    %1984 = vmatmul.bf16.gmra.mxu0 %v140
    %v1985 = vpop.f32.mrf.mxu0
    %v1986 = vadd.f32 %v1973, %v1985
    %v1987 = vpop.f32.mrf.mxu0
    %1988 = vdwg.mxu0
    %1989 = vmatpush.bf16.msra.mxu0 %v1432
    %1990 = vmatpush.bf16.msra.mxu0 %v1428
    %1991 = vmatpush.bf16.msra.mxu0 %v1424
    %1992 = vmatpush.bf16.msra.mxu0 %v1420
    %1993 = vmatpush.bf16.msra.mxu0 %v1416
    %1994 = vmatpush.bf16.msra.mxu0 %v1412
    %1995 = vmatpush.bf16.msra.mxu0 %v1408
    %1996 = vmatpush.bf16.msra.mxu0 %v1404
    %1997 = vmatmul.bf16.gmra.mxu0 %v141
    %v1998 = vpop.f32.mrf.mxu0
    %v1999 = vadd.f32 %v1986, %v1998
    %v2000 = vpop.f32.mrf.mxu0
    %2001 = vdwg.mxu0
    %2002 = vmatpush.bf16.msra.mxu0 %v1209
    %2003 = vmatpush.bf16.msra.mxu0 %v1205
    %2004 = vmatpush.bf16.msra.mxu0 %v1201
    %2005 = vmatpush.bf16.msra.mxu0 %v1197
    %2006 = vmatpush.bf16.msra.mxu0 %v1193
    %2007 = vmatpush.bf16.msra.mxu0 %v1189
    %2008 = vmatpush.bf16.msra.mxu0 %v1185
    %2009 = vmatpush.bf16.msra.mxu0 %v1181
    %2010 = vmatmul.bf16.gmra.mxu0 %v134
    %v2011 = vpop.f32.mrf.mxu0
    %v2012 = vadd.f32 %v405, %v2011
    %v2013 = vpop.f32.mrf.mxu0
    %2014 = vdwg.mxu0
    %2015 = vmatpush.bf16.msra.mxu0 %v1241
    %2016 = vmatpush.bf16.msra.mxu0 %v1237
    %2017 = vmatpush.bf16.msra.mxu0 %v1233
    %2018 = vmatpush.bf16.msra.mxu0 %v1229
    %2019 = vmatpush.bf16.msra.mxu0 %v1225
    %2020 = vmatpush.bf16.msra.mxu0 %v1221
    %2021 = vmatpush.bf16.msra.mxu0 %v1217
    %2022 = vmatpush.bf16.msra.mxu0 %v1213
    %2023 = vmatmul.bf16.gmra.mxu0 %v135
    %v2024 = vpop.f32.mrf.mxu0
    %v2025 = vadd.f32 %v2012, %v2024
    %v2026 = vpop.f32.mrf.mxu0
    %2027 = vdwg.mxu0
    %2028 = vmatpush.bf16.msra.mxu0 %v1273
    %2029 = vmatpush.bf16.msra.mxu0 %v1269
    %2030 = vmatpush.bf16.msra.mxu0 %v1265
    %2031 = vmatpush.bf16.msra.mxu0 %v1261
    %2032 = vmatpush.bf16.msra.mxu0 %v1257
    %2033 = vmatpush.bf16.msra.mxu0 %v1253
    %2034 = vmatpush.bf16.msra.mxu0 %v1249
    %2035 = vmatpush.bf16.msra.mxu0 %v1245
    %2036 = vmatmul.bf16.gmra.mxu0 %v136
    %v2037 = vpop.f32.mrf.mxu0
    %v2038 = vadd.f32 %v2025, %v2037
    %v2039 = vpop.f32.mrf.mxu0
    %2040 = vdwg.mxu0
    %2041 = vmatpush.bf16.msra.mxu0 %v1305
    %2042 = vmatpush.bf16.msra.mxu0 %v1301
    %2043 = vmatpush.bf16.msra.mxu0 %v1297
    %2044 = vmatpush.bf16.msra.mxu0 %v1293
    %2045 = vmatpush.bf16.msra.mxu0 %v1289
    %2046 = vmatpush.bf16.msra.mxu0 %v1285
    %2047 = vmatpush.bf16.msra.mxu0 %v1281
    %2048 = vmatpush.bf16.msra.mxu0 %v1277
    %2049 = vmatmul.bf16.gmra.mxu0 %v137
    %v2050 = vpop.f32.mrf.mxu0
    %v2051 = vadd.f32 %v2038, %v2050
    %v2052 = vpop.f32.mrf.mxu0
    %2053 = vdwg.mxu0
    %2054 = vmatpush.bf16.msra.mxu0 %v1337
    %2055 = vmatpush.bf16.msra.mxu0 %v1333
    %2056 = vmatpush.bf16.msra.mxu0 %v1329
    %2057 = vmatpush.bf16.msra.mxu0 %v1325
    %2058 = vmatpush.bf16.msra.mxu0 %v1321
    %2059 = vmatpush.bf16.msra.mxu0 %v1317
    %2060 = vmatpush.bf16.msra.mxu0 %v1313
    %2061 = vmatpush.bf16.msra.mxu0 %v1309
    %2062 = vmatmul.bf16.gmra.mxu0 %v138
    %v2063 = vpop.f32.mrf.mxu0
    %v2064 = vadd.f32 %v2051, %v2063
    %v2065 = vpop.f32.mrf.mxu0
    %2066 = vdwg.mxu0
    %2067 = vmatpush.bf16.msra.mxu0 %v1369
    %2068 = vmatpush.bf16.msra.mxu0 %v1365
    %2069 = vmatpush.bf16.msra.mxu0 %v1361
    %2070 = vmatpush.bf16.msra.mxu0 %v1357
    %2071 = vmatpush.bf16.msra.mxu0 %v1353
    %2072 = vmatpush.bf16.msra.mxu0 %v1349
    %2073 = vmatpush.bf16.msra.mxu0 %v1345
    %2074 = vmatpush.bf16.msra.mxu0 %v1341
    %2075 = vmatmul.bf16.gmra.mxu0 %v139
    %v2076 = vpop.f32.mrf.mxu0
    %v2077 = vadd.f32 %v2064, %v2076
    %v2078 = vpop.f32.mrf.mxu0
    %2079 = vdwg.mxu0
    %2080 = vmatpush.bf16.msra.mxu0 %v1401
    %2081 = vmatpush.bf16.msra.mxu0 %v1397
    %2082 = vmatpush.bf16.msra.mxu0 %v1393
    %2083 = vmatpush.bf16.msra.mxu0 %v1389
    %2084 = vmatpush.bf16.msra.mxu0 %v1385
    %2085 = vmatpush.bf16.msra.mxu0 %v1381
    %2086 = vmatpush.bf16.msra.mxu0 %v1377
    %2087 = vmatpush.bf16.msra.mxu0 %v1373
    %2088 = vmatmul.bf16.gmra.mxu0 %v140
    %v2089 = vpop.f32.mrf.mxu0
    %v2090 = vadd.f32 %v2077, %v2089
    %v2091 = vpop.f32.mrf.mxu0
    %2092 = vdwg.mxu0
    %2093 = vmatpush.bf16.msra.mxu0 %v1433
    %2094 = vmatpush.bf16.msra.mxu0 %v1429
    %2095 = vmatpush.bf16.msra.mxu0 %v1425
    %2096 = vmatpush.bf16.msra.mxu0 %v1421
    %2097 = vmatpush.bf16.msra.mxu0 %v1417
    %2098 = vmatpush.bf16.msra.mxu0 %v1413
    %2099 = vmatpush.bf16.msra.mxu0 %v1409
    %2100 = vmatpush.bf16.msra.mxu0 %v1405
    %2101 = vmatmul.bf16.gmra.mxu0 %v141
    %v2102 = vpop.f32.mrf.mxu0
    %v2103 = vadd.f32 %v2090, %v2102
    %v2104 = vpop.f32.mrf.mxu0
    %2105 = vdwg.mxu0
    %v2106 = vmax.f32 %v1791, 0.0
    %v2107 = vmax.f32 %v1895, 0.0
    %v2108 = vmax.f32 %v1999, 0.0
    %v2109 = vmax.f32 %v2103, 0.0
    %v2110 = vpack.c.bf16 %v2106, %v2106
    %v2111 = vpack.c.bf16 %v2107, %v2107
    %v2112 = vpack.c.bf16 %v2108, %v2108
    %v2113 = vpack.c.bf16 %v2109, %v2109
    %v2114 = vld [vmem:[#allocation4] sm:$0xff]
    %v2115 = vld [vmem:[#allocation4 + $0x8] sm:$0xff]
    %v2116 = vld [vmem:[#allocation4 + $0x10] sm:$0xff]
    %v2117 = vld [vmem:[#allocation4 + $0x18] sm:$0xff]
    %v2118 = vld [vmem:[#allocation4 + $0x20] sm:$0xff]
    %v2119 = vld [vmem:[#allocation4 + $0x28] sm:$0xff]
    %v2120 = vld [vmem:[#allocation4 + $0x30] sm:$0xff]
    %v2121 = vld [vmem:[#allocation4 + $0x38] sm:$0xff]
    %v2122 = vld [vmem:[#allocation4 + $0x40] sm:$0xff]
    %v2123 = vld [vmem:[#allocation4 + $0x48] sm:$0xff]
    %v2124 = vld [vmem:[#allocation4 + $0x50] sm:$0xff]
    %v2125 = vld [vmem:[#allocation4 + $0x58] sm:$0xff]
    %v2126 = vld [vmem:[#allocation4 + $0x60] sm:$0xff]
    %v2127 = vld [vmem:[#allocation4 + $0x68] sm:$0xff]
    %v2128 = vld [vmem:[#allocation4 + $0x70] sm:$0xff]
    %v2129 = vld [vmem:[#allocation4 + $0x78] sm:$0xff]
    %v2130 = vld [vmem:[#allocation4 + $0x80] sm:$0xff]
    %v2131 = vld [vmem:[#allocation4 + $0x88] sm:$0xff]
    %v2132 = vld [vmem:[#allocation4 + $0x90] sm:$0xff]
    %v2133 = vld [vmem:[#allocation4 + $0x98] sm:$0xff]
    %v2134 = vld [vmem:[#allocation4 + $0xa0] sm:$0xff]
    %v2135 = vld [vmem:[#allocation4 + $0xa8] sm:$0xff]
    %v2136 = vld [vmem:[#allocation4 + $0xb0] sm:$0xff]
    %v2137 = vld [vmem:[#allocation4 + $0xb8] sm:$0xff]
    %v2138 = vld [vmem:[#allocation4 + $0xc0] sm:$0xff]
    %v2139 = vld [vmem:[#allocation4 + $0xc8] sm:$0xff]
    %v2140 = vld [vmem:[#allocation4 + $0xd0] sm:$0xff]
    %v2141 = vld [vmem:[#allocation4 + $0xd8] sm:$0xff]
    %v2142 = vld [vmem:[#allocation4 + $0xe0] sm:$0xff]
    %v2143 = vld [vmem:[#allocation4 + $0xe8] sm:$0xff]
    %v2144 = vld [vmem:[#allocation4 + $0xf0] sm:$0xff]
    %v2145 = vld [vmem:[#allocation4 + $0xf8] sm:$0xff]
    %v2146 = vld [vmem:[#allocation4 + $0x100] sm:$0xff]
    %v2147 = vld [vmem:[#allocation4 + $0x108] sm:$0xff]
    %v2148 = vld [vmem:[#allocation4 + $0x110] sm:$0xff]
    %v2149 = vld [vmem:[#allocation4 + $0x118] sm:$0xff]
    %v2150 = vld [vmem:[#allocation4 + $0x120] sm:$0xff]
    %v2151 = vld [vmem:[#allocation4 + $0x128] sm:$0xff]
    %v2152 = vld [vmem:[#allocation4 + $0x130] sm:$0xff]
    %v2153 = vld [vmem:[#allocation4 + $0x138] sm:$0xff]
    %v2154 = vld [vmem:[#allocation4 + $0x140] sm:$0xff]
    %v2155 = vld [vmem:[#allocation4 + $0x148] sm:$0xff]
    %v2156 = vld [vmem:[#allocation4 + $0x150] sm:$0xff]
    %v2157 = vld [vmem:[#allocation4 + $0x158] sm:$0xff]
    %v2158 = vld [vmem:[#allocation4 + $0x160] sm:$0xff]
    %v2159 = vld [vmem:[#allocation4 + $0x168] sm:$0xff]
    %v2160 = vld [vmem:[#allocation4 + $0x170] sm:$0xff]
    %v2161 = vld [vmem:[#allocation4 + $0x178] sm:$0xff]
    %v2162 = vld [vmem:[#allocation4 + $0x180] sm:$0xff]
    %v2163 = vld [vmem:[#allocation4 + $0x188] sm:$0xff]
    %v2164 = vld [vmem:[#allocation4 + $0x190] sm:$0xff]
    %v2165 = vld [vmem:[#allocation4 + $0x198] sm:$0xff]
    %v2166 = vld [vmem:[#allocation4 + $0x1a0] sm:$0xff]
    %v2167 = vld [vmem:[#allocation4 + $0x1a8] sm:$0xff]
    %v2168 = vld [vmem:[#allocation4 + $0x1b0] sm:$0xff]
    %v2169 = vld [vmem:[#allocation4 + $0x1b8] sm:$0xff]
    %v2170 = vld [vmem:[#allocation4 + $0x1c0] sm:$0xff]
    %v2171 = vld [vmem:[#allocation4 + $0x1c8] sm:$0xff]
    %v2172 = vld [vmem:[#allocation4 + $0x1d0] sm:$0xff]
    %v2173 = vld [vmem:[#allocation4 + $0x1d8] sm:$0xff]
    %v2174 = vld [vmem:[#allocation4 + $0x1e0] sm:$0xff]
    %v2175 = vld [vmem:[#allocation4 + $0x1e8] sm:$0xff]
    %v2176 = vld [vmem:[#allocation4 + $0x1f0] sm:$0xff]
    %v2177 = vld [vmem:[#allocation4 + $0x1f8] sm:$0xff]
    %v2178 = vld [vmem:[%s5] sm:$0x3]
    %v2180 = vperm.slane %v2178, 0
    %v2181 = vperm.slane %v2178, 1
    %v2248 = vunpack.c.l.b16 %v2114
    %v2249 = vunpack.c.h.b16 %v2114
    %v2250 = vunpack.c.l.b16 %v2115
    %v2251 = vunpack.c.h.b16 %v2115
    %v2252 = vunpack.c.l.b16 %v2116
    %v2253 = vunpack.c.h.b16 %v2116
    %v2254 = vunpack.c.l.b16 %v2117
    %v2255 = vunpack.c.h.b16 %v2117
    %v2256 = vunpack.c.l.b16 %v2118
    %v2257 = vunpack.c.h.b16 %v2118
    %v2258 = vunpack.c.l.b16 %v2119
    %v2259 = vunpack.c.h.b16 %v2119
    %v2260 = vunpack.c.l.b16 %v2120
    %v2261 = vunpack.c.h.b16 %v2120
    %v2262 = vunpack.c.l.b16 %v2121
    %v2263 = vunpack.c.h.b16 %v2121
    %v2264 = vunpack.c.l.b16 %v2122
    %v2265 = vunpack.c.h.b16 %v2122
    %v2266 = vunpack.c.l.b16 %v2123
    %v2267 = vunpack.c.h.b16 %v2123
    %v2268 = vunpack.c.l.b16 %v2124
    %v2269 = vunpack.c.h.b16 %v2124
    %v2270 = vunpack.c.l.b16 %v2125
    %v2271 = vunpack.c.h.b16 %v2125
    %v2272 = vunpack.c.l.b16 %v2126
    %v2273 = vunpack.c.h.b16 %v2126
    %v2274 = vunpack.c.l.b16 %v2127
    %v2275 = vunpack.c.h.b16 %v2127
    %v2276 = vunpack.c.l.b16 %v2128
    %v2277 = vunpack.c.h.b16 %v2128
    %v2278 = vunpack.c.l.b16 %v2129
    %v2279 = vunpack.c.h.b16 %v2129
    %v2280 = vunpack.c.l.b16 %v2130
    %v2281 = vunpack.c.h.b16 %v2130
    %v2282 = vunpack.c.l.b16 %v2131
    %v2283 = vunpack.c.h.b16 %v2131
    %v2284 = vunpack.c.l.b16 %v2132
    %v2285 = vunpack.c.h.b16 %v2132
    %v2286 = vunpack.c.l.b16 %v2133
    %v2287 = vunpack.c.h.b16 %v2133
    %v2288 = vunpack.c.l.b16 %v2134
    %v2289 = vunpack.c.h.b16 %v2134
    %v2290 = vunpack.c.l.b16 %v2135
    %v2291 = vunpack.c.h.b16 %v2135
    %v2292 = vunpack.c.l.b16 %v2136
    %v2293 = vunpack.c.h.b16 %v2136
    %v2294 = vunpack.c.l.b16 %v2137
    %v2295 = vunpack.c.h.b16 %v2137
    %v2296 = vunpack.c.l.b16 %v2138
    %v2297 = vunpack.c.h.b16 %v2138
    %v2298 = vunpack.c.l.b16 %v2139
    %v2299 = vunpack.c.h.b16 %v2139
    %v2300 = vunpack.c.l.b16 %v2140
    %v2301 = vunpack.c.h.b16 %v2140
    %v2302 = vunpack.c.l.b16 %v2141
    %v2303 = vunpack.c.h.b16 %v2141
    %v2304 = vunpack.c.l.b16 %v2142
    %v2305 = vunpack.c.h.b16 %v2142
    %v2306 = vunpack.c.l.b16 %v2143
    %v2307 = vunpack.c.h.b16 %v2143
    %v2308 = vunpack.c.l.b16 %v2144
    %v2309 = vunpack.c.h.b16 %v2144
    %v2310 = vunpack.c.l.b16 %v2145
    %v2311 = vunpack.c.h.b16 %v2145
    %v2312 = vunpack.c.l.b16 %v2146
    %v2313 = vunpack.c.h.b16 %v2146
    %v2314 = vunpack.c.l.b16 %v2147
    %v2315 = vunpack.c.h.b16 %v2147
    %v2316 = vunpack.c.l.b16 %v2148
    %v2317 = vunpack.c.h.b16 %v2148
    %v2318 = vunpack.c.l.b16 %v2149
    %v2319 = vunpack.c.h.b16 %v2149
    %v2320 = vunpack.c.l.b16 %v2150
    %v2321 = vunpack.c.h.b16 %v2150
    %v2322 = vunpack.c.l.b16 %v2151
    %v2323 = vunpack.c.h.b16 %v2151
    %v2324 = vunpack.c.l.b16 %v2152
    %v2325 = vunpack.c.h.b16 %v2152
    %v2326 = vunpack.c.l.b16 %v2153
    %v2327 = vunpack.c.h.b16 %v2153
    %v2328 = vunpack.c.l.b16 %v2154
    %v2329 = vunpack.c.h.b16 %v2154
    %v2330 = vunpack.c.l.b16 %v2155
    %v2331 = vunpack.c.h.b16 %v2155
    %v2332 = vunpack.c.l.b16 %v2156
    %v2333 = vunpack.c.h.b16 %v2156
    %v2334 = vunpack.c.l.b16 %v2157
    %v2335 = vunpack.c.h.b16 %v2157
    %v2336 = vunpack.c.l.b16 %v2158
    %v2337 = vunpack.c.h.b16 %v2158
    %v2338 = vunpack.c.l.b16 %v2159
    %v2339 = vunpack.c.h.b16 %v2159
    %v2340 = vunpack.c.l.b16 %v2160
    %v2341 = vunpack.c.h.b16 %v2160
    %v2342 = vunpack.c.l.b16 %v2161
    %v2343 = vunpack.c.h.b16 %v2161
    %v2344 = vunpack.c.l.b16 %v2162
    %v2345 = vunpack.c.h.b16 %v2162
    %v2346 = vunpack.c.l.b16 %v2163
    %v2347 = vunpack.c.h.b16 %v2163
    %v2348 = vunpack.c.l.b16 %v2164
    %v2349 = vunpack.c.h.b16 %v2164
    %v2350 = vunpack.c.l.b16 %v2165
    %v2351 = vunpack.c.h.b16 %v2165
    %v2352 = vunpack.c.l.b16 %v2166
    %v2353 = vunpack.c.h.b16 %v2166
    %v2354 = vunpack.c.l.b16 %v2167
    %v2355 = vunpack.c.h.b16 %v2167
    %v2356 = vunpack.c.l.b16 %v2168
    %v2357 = vunpack.c.h.b16 %v2168
    %v2358 = vunpack.c.l.b16 %v2169
    %v2359 = vunpack.c.h.b16 %v2169
    %v2360 = vunpack.c.l.b16 %v2170
    %v2361 = vunpack.c.h.b16 %v2170
    %v2362 = vunpack.c.l.b16 %v2171
    %v2363 = vunpack.c.h.b16 %v2171
    %v2364 = vunpack.c.l.b16 %v2172
    %v2365 = vunpack.c.h.b16 %v2172
    %v2366 = vunpack.c.l.b16 %v2173
    %v2367 = vunpack.c.h.b16 %v2173
    %v2368 = vunpack.c.l.b16 %v2174
    %v2369 = vunpack.c.h.b16 %v2174
    %v2370 = vunpack.c.l.b16 %v2175
    %v2371 = vunpack.c.h.b16 %v2175
    %v2372 = vunpack.c.l.b16 %v2176
    %v2373 = vunpack.c.h.b16 %v2176
    %v2374 = vunpack.c.l.b16 %v2177
    %v2375 = vunpack.c.h.b16 %v2177
    %v2376 = vpack.c.b16 %v2250, %v2248
    %v2377 = vpack.c.b16 %v2251, %v2249
    %v2378 = vpack.c.b16 %v2254, %v2252
    %v2379 = vpack.c.b16 %v2255, %v2253
    %v2380 = vpack.c.b16 %v2258, %v2256
    %v2381 = vpack.c.b16 %v2259, %v2257
    %v2382 = vpack.c.b16 %v2262, %v2260
    %v2383 = vpack.c.b16 %v2263, %v2261
    %v2384 = vpack.c.b16 %v2266, %v2264
    %v2385 = vpack.c.b16 %v2267, %v2265
    %v2386 = vpack.c.b16 %v2270, %v2268
    %v2387 = vpack.c.b16 %v2271, %v2269
    %v2388 = vpack.c.b16 %v2274, %v2272
    %v2389 = vpack.c.b16 %v2275, %v2273
    %v2390 = vpack.c.b16 %v2278, %v2276
    %v2391 = vpack.c.b16 %v2279, %v2277
    %v2392 = vpack.c.b16 %v2282, %v2280
    %v2393 = vpack.c.b16 %v2283, %v2281
    %v2394 = vpack.c.b16 %v2286, %v2284
    %v2395 = vpack.c.b16 %v2287, %v2285
    %v2396 = vpack.c.b16 %v2290, %v2288
    %v2397 = vpack.c.b16 %v2291, %v2289
    %v2398 = vpack.c.b16 %v2294, %v2292
    %v2399 = vpack.c.b16 %v2295, %v2293
    %v2400 = vpack.c.b16 %v2298, %v2296
    %v2401 = vpack.c.b16 %v2299, %v2297
    %v2402 = vpack.c.b16 %v2302, %v2300
    %v2403 = vpack.c.b16 %v2303, %v2301
    %v2404 = vpack.c.b16 %v2306, %v2304
    %v2405 = vpack.c.b16 %v2307, %v2305
    %v2406 = vpack.c.b16 %v2310, %v2308
    %v2407 = vpack.c.b16 %v2311, %v2309
    %v2408 = vpack.c.b16 %v2314, %v2312
    %v2409 = vpack.c.b16 %v2315, %v2313
    %v2410 = vpack.c.b16 %v2318, %v2316
    %v2411 = vpack.c.b16 %v2319, %v2317
    %v2412 = vpack.c.b16 %v2322, %v2320
    %v2413 = vpack.c.b16 %v2323, %v2321
    %v2414 = vpack.c.b16 %v2326, %v2324
    %v2415 = vpack.c.b16 %v2327, %v2325
    %v2416 = vpack.c.b16 %v2330, %v2328
    %v2417 = vpack.c.b16 %v2331, %v2329
    %v2418 = vpack.c.b16 %v2334, %v2332
    %v2419 = vpack.c.b16 %v2335, %v2333
    %v2420 = vpack.c.b16 %v2338, %v2336
    %v2421 = vpack.c.b16 %v2339, %v2337
    %v2422 = vpack.c.b16 %v2342, %v2340
    %v2423 = vpack.c.b16 %v2343, %v2341
    %v2424 = vpack.c.b16 %v2346, %v2344
    %v2425 = vpack.c.b16 %v2347, %v2345
    %v2426 = vpack.c.b16 %v2350, %v2348
    %v2427 = vpack.c.b16 %v2351, %v2349
    %v2428 = vpack.c.b16 %v2354, %v2352
    %v2429 = vpack.c.b16 %v2355, %v2353
    %v2430 = vpack.c.b16 %v2358, %v2356
    %v2431 = vpack.c.b16 %v2359, %v2357
    %v2432 = vpack.c.b16 %v2362, %v2360
    %v2433 = vpack.c.b16 %v2363, %v2361
    %v2434 = vpack.c.b16 %v2366, %v2364
    %v2435 = vpack.c.b16 %v2367, %v2365
    %v2436 = vpack.c.b16 %v2370, %v2368
    %v2437 = vpack.c.b16 %v2371, %v2369
    %v2438 = vpack.c.b16 %v2374, %v2372
    %v2439 = vpack.c.b16 %v2375, %v2373
    %2504 = vmatpush.bf16.msra.mxu0 %v2390
    %2505 = vmatpush.bf16.msra.mxu0 %v2388
    %2506 = vmatpush.bf16.msra.mxu0 %v2386
    %2507 = vmatpush.bf16.msra.mxu0 %v2384
    %2508 = vmatpush.bf16.msra.mxu0 %v2382
    %2509 = vmatpush.bf16.msra.mxu0 %v2380
    %2510 = vmatpush.bf16.msra.mxu0 %v2378
    %2511 = vmatpush.bf16.msra.mxu0 %v2376
    %2512 = vmatmul.bf16.gmra.mxu0 %v2110
    %v2513 = vpop.f32.mrf.mxu0
    %v2514 = vadd.f32 %v2180, %v2513
    %v2515 = vpop.f32.mrf.mxu0
    %2516 = vdwg.mxu0
    %2517 = vmatpush.bf16.msra.mxu0 %v2406
    %2518 = vmatpush.bf16.msra.mxu0 %v2404
    %2519 = vmatpush.bf16.msra.mxu0 %v2402
    %2520 = vmatpush.bf16.msra.mxu0 %v2400
    %2521 = vmatpush.bf16.msra.mxu0 %v2398
    %2522 = vmatpush.bf16.msra.mxu0 %v2396
    %2523 = vmatpush.bf16.msra.mxu0 %v2394
    %2524 = vmatpush.bf16.msra.mxu0 %v2392
    %2525 = vmatmul.bf16.gmra.mxu0 %v2111
    %v2526 = vpop.f32.mrf.mxu0
    %v2527 = vadd.f32 %v2514, %v2526
    %v2528 = vpop.f32.mrf.mxu0
    %2529 = vdwg.mxu0
    %2530 = vmatpush.bf16.msra.mxu0 %v2422
    %2531 = vmatpush.bf16.msra.mxu0 %v2420
    %2532 = vmatpush.bf16.msra.mxu0 %v2418
    %2533 = vmatpush.bf16.msra.mxu0 %v2416
    %2534 = vmatpush.bf16.msra.mxu0 %v2414
    %2535 = vmatpush.bf16.msra.mxu0 %v2412
    %2536 = vmatpush.bf16.msra.mxu0 %v2410
    %2537 = vmatpush.bf16.msra.mxu0 %v2408
    %2538 = vmatmul.bf16.gmra.mxu0 %v2112
    %v2539 = vpop.f32.mrf.mxu0
    %v2540 = vadd.f32 %v2527, %v2539
    %v2541 = vpop.f32.mrf.mxu0
    %2542 = vdwg.mxu0
    %2543 = vmatpush.bf16.msra.mxu0 %v2438
    %2544 = vmatpush.bf16.msra.mxu0 %v2436
    %2545 = vmatpush.bf16.msra.mxu0 %v2434
    %2546 = vmatpush.bf16.msra.mxu0 %v2432
    %2547 = vmatpush.bf16.msra.mxu0 %v2430
    %2548 = vmatpush.bf16.msra.mxu0 %v2428
    %2549 = vmatpush.bf16.msra.mxu0 %v2426
    %2550 = vmatpush.bf16.msra.mxu0 %v2424
    %2551 = vmatmul.bf16.gmra.mxu0 %v2113
    %v2552 = vpop.f32.mrf.mxu0
    %v2553 = vadd.f32 %v2540, %v2552
    %v2554 = vpop.f32.mrf.mxu0
    %2555 = vdwg.mxu0
    %2556 = vmatpush.bf16.msra.mxu0 %v2391
    %2557 = vmatpush.bf16.msra.mxu0 %v2389
    %2558 = vmatpush.bf16.msra.mxu0 %v2387
    %2559 = vmatpush.bf16.msra.mxu0 %v2385
    %2560 = vmatpush.bf16.msra.mxu0 %v2383
    %2561 = vmatpush.bf16.msra.mxu0 %v2381
    %2562 = vmatpush.bf16.msra.mxu0 %v2379
    %2563 = vmatpush.bf16.msra.mxu0 %v2377
    %2564 = vmatmul.bf16.gmra.mxu0 %v2110
    %v2565 = vpop.f32.mrf.mxu0
    %v2566 = vadd.f32 %v2181, %v2565
    %v2567 = vpop.f32.mrf.mxu0
    %2568 = vdwg.mxu0
    %2569 = vmatpush.bf16.msra.mxu0 %v2407
    %2570 = vmatpush.bf16.msra.mxu0 %v2405
    %2571 = vmatpush.bf16.msra.mxu0 %v2403
    %2572 = vmatpush.bf16.msra.mxu0 %v2401
    %2573 = vmatpush.bf16.msra.mxu0 %v2399
    %2574 = vmatpush.bf16.msra.mxu0 %v2397
    %2575 = vmatpush.bf16.msra.mxu0 %v2395
    %2576 = vmatpush.bf16.msra.mxu0 %v2393
    %2577 = vmatmul.bf16.gmra.mxu0 %v2111
    %v2578 = vpop.f32.mrf.mxu0
    %v2579 = vadd.f32 %v2566, %v2578
    %v2580 = vpop.f32.mrf.mxu0
    %2581 = vdwg.mxu0
    %2582 = vmatpush.bf16.msra.mxu0 %v2423
    %2583 = vmatpush.bf16.msra.mxu0 %v2421
    %2584 = vmatpush.bf16.msra.mxu0 %v2419
    %2585 = vmatpush.bf16.msra.mxu0 %v2417
    %2586 = vmatpush.bf16.msra.mxu0 %v2415
    %2587 = vmatpush.bf16.msra.mxu0 %v2413
    %2588 = vmatpush.bf16.msra.mxu0 %v2411
    %2589 = vmatpush.bf16.msra.mxu0 %v2409
    %2590 = vmatmul.bf16.gmra.mxu0 %v2112
    %v2591 = vpop.f32.mrf.mxu0
    %v2592 = vadd.f32 %v2579, %v2591
    %v2593 = vpop.f32.mrf.mxu0
    %2594 = vdwg.mxu0
    %2595 = vmatpush.bf16.msra.mxu0 %v2439
    %2596 = vmatpush.bf16.msra.mxu0 %v2437
    %2597 = vmatpush.bf16.msra.mxu0 %v2435
    %2598 = vmatpush.bf16.msra.mxu0 %v2433
    %2599 = vmatpush.bf16.msra.mxu0 %v2431
    %2600 = vmatpush.bf16.msra.mxu0 %v2429
    %2601 = vmatpush.bf16.msra.mxu0 %v2427
    %2602 = vmatpush.bf16.msra.mxu0 %v2425
    %2603 = vmatmul.bf16.gmra.mxu0 %v2113
    %v2604 = vpop.f32.mrf.mxu0
    %v2605 = vadd.f32 %v2592, %v2604
    %v2606 = vpop.f32.mrf.mxu0
    %2607 = vdwg.mxu0
    %v2608 = vmax.f32 %v2553, 0.0
    %v2609 = vmax.f32 %v2605, 0.0
    %v2610 = vpack.c.bf16 %v2608, %v2608
    %v2611 = vpack.c.bf16 %v2609, %v2609
    %v2612 = vld [vmem:[#allocation6] sm:$0xf]
    %v2613 = vld [vmem:[#allocation6 + $0x4] sm:$0xf]
    %v2614 = vld [vmem:[#allocation6 + $0x8] sm:$0xf]
    %v2615 = vld [vmem:[#allocation6 + $0xc] sm:$0xf]
    %v2616 = vld [vmem:[#allocation6 + $0x10] sm:$0xf]
    %v2617 = vld [vmem:[#allocation6 + $0x14] sm:$0xf]
    %v2618 = vld [vmem:[#allocation6 + $0x18] sm:$0xf]
    %v2619 = vld [vmem:[#allocation6 + $0x1c] sm:$0xf]
    %v2620 = vld [vmem:[#allocation6 + $0x20] sm:$0xf]
    %v2621 = vld [vmem:[#allocation6 + $0x24] sm:$0xf]
    %v2622 = vld [vmem:[#allocation6 + $0x28] sm:$0xf]
    %v2623 = vld [vmem:[#allocation6 + $0x2c] sm:$0xf]
    %v2624 = vld [vmem:[#allocation6 + $0x30] sm:$0xf]
    %v2625 = vld [vmem:[#allocation6 + $0x34] sm:$0xf]
    %v2626 = vld [vmem:[#allocation6 + $0x38] sm:$0xf]
    %v2627 = vld [vmem:[#allocation6 + $0x3c] sm:$0xf]
    %v2628 = vld [vmem:[#allocation6 + $0x40] sm:$0xf]
    %v2629 = vld [vmem:[#allocation6 + $0x44] sm:$0xf]
    %v2630 = vld [vmem:[#allocation6 + $0x48] sm:$0xf]
    %v2631 = vld [vmem:[#allocation6 + $0x4c] sm:$0xf]
    %v2632 = vld [vmem:[#allocation6 + $0x50] sm:$0xf]
    %v2633 = vld [vmem:[#allocation6 + $0x54] sm:$0xf]
    %v2634 = vld [vmem:[#allocation6 + $0x58] sm:$0xf]
    %v2635 = vld [vmem:[#allocation6 + $0x5c] sm:$0xf]
    %v2636 = vld [vmem:[#allocation6 + $0x60] sm:$0xf]
    %v2637 = vld [vmem:[#allocation6 + $0x64] sm:$0xf]
    %v2638 = vld [vmem:[#allocation6 + $0x68] sm:$0xf]
    %v2639 = vld [vmem:[#allocation6 + $0x6c] sm:$0xf]
    %v2640 = vld [vmem:[#allocation6 + $0x70] sm:$0xf]
    %v2641 = vld [vmem:[#allocation6 + $0x74] sm:$0xf]
    %v2642 = vld [vmem:[#allocation6 + $0x78] sm:$0xf]
    %v2643 = vld [vmem:[#allocation6 + $0x7c] sm:$0xf]
    %v2644 = vld [vmem:[%s7] sm:$0xf]
    %v2645 = vld [vmem:[%s7 + $0x4] sm:$0xf]
    %v2646 = vld [vmem:[%s8] sm:$0x1]
    %v2649 = vunpack.c.l.b16 %v2644
    %v2650 = vunpack.c.l.b16 %v2645
    %v2651 = vpack.c.b16 %v2650, %v2649
    %vm2653 = vcmask 130048
    %v2655 = vsel %vm2653, %v143, 0
    %2657 = vmatpush.bf16.msra.mxu0 0
    %2658 = vmatpush.bf16.msra.mxu0 0
    %2659 = vmatpush.bf16.msra.mxu0 0
    %2660 = vmatpush.bf16.msra.mxu0 0
    %2661 = vmatpush.bf16.msra.mxu0 0
    %2662 = vmatpush.bf16.msra.mxu0 0
    %2663 = vmatpush.bf16.msra.mxu0 0
    %2664 = vmatpush.bf16.msra.mxu0 %v2651
    %2665 = vmatmul.bf16.gmra.mxu0 %v2655
    %v2666 = vpop.f32.mrf.mxu0
    %v2667 = vadd.f32 0.0, %v2666
    %v2668 = vpop.f32.mrf.mxu0
    %2669 = vdwg.mxu0
    %v2702 = vunpack.c.l.b16 %v2612
    %v2703 = vunpack.c.l.b16 %v2613
    %v2704 = vunpack.c.l.b16 %v2614
    %v2705 = vunpack.c.l.b16 %v2615
    %v2706 = vunpack.c.l.b16 %v2616
    %v2707 = vunpack.c.l.b16 %v2617
    %v2708 = vunpack.c.l.b16 %v2618
    %v2709 = vunpack.c.l.b16 %v2619
    %v2710 = vunpack.c.l.b16 %v2620
    %v2711 = vunpack.c.l.b16 %v2621
    %v2712 = vunpack.c.l.b16 %v2622
    %v2713 = vunpack.c.l.b16 %v2623
    %v2714 = vunpack.c.l.b16 %v2624
    %v2715 = vunpack.c.l.b16 %v2625
    %v2716 = vunpack.c.l.b16 %v2626
    %v2717 = vunpack.c.l.b16 %v2627
    %v2718 = vunpack.c.l.b16 %v2628
    %v2719 = vunpack.c.l.b16 %v2629
    %v2720 = vunpack.c.l.b16 %v2630
    %v2721 = vunpack.c.l.b16 %v2631
    %v2722 = vunpack.c.l.b16 %v2632
    %v2723 = vunpack.c.l.b16 %v2633
    %v2724 = vunpack.c.l.b16 %v2634
    %v2725 = vunpack.c.l.b16 %v2635
    %v2726 = vunpack.c.l.b16 %v2636
    %v2727 = vunpack.c.l.b16 %v2637
    %v2728 = vunpack.c.l.b16 %v2638
    %v2729 = vunpack.c.l.b16 %v2639
    %v2730 = vunpack.c.l.b16 %v2640
    %v2731 = vunpack.c.l.b16 %v2641
    %v2732 = vunpack.c.l.b16 %v2642
    %v2733 = vunpack.c.l.b16 %v2643
    %v2734 = vpack.c.b16 %v2703, %v2702
    %v2735 = vpack.c.b16 %v2705, %v2704
    %v2736 = vpack.c.b16 %v2707, %v2706
    %v2737 = vpack.c.b16 %v2709, %v2708
    %v2738 = vpack.c.b16 %v2711, %v2710
    %v2739 = vpack.c.b16 %v2713, %v2712
    %v2740 = vpack.c.b16 %v2715, %v2714
    %v2741 = vpack.c.b16 %v2717, %v2716
    %v2742 = vpack.c.b16 %v2719, %v2718
    %v2743 = vpack.c.b16 %v2721, %v2720
    %v2744 = vpack.c.b16 %v2723, %v2722
    %v2745 = vpack.c.b16 %v2725, %v2724
    %v2746 = vpack.c.b16 %v2727, %v2726
    %v2747 = vpack.c.b16 %v2729, %v2728
    %v2748 = vpack.c.b16 %v2731, %v2730
    %v2749 = vpack.c.b16 %v2733, %v2732
    %2766 = vmatpush.bf16.msra.mxu0 %v2741
    %2767 = vmatpush.bf16.msra.mxu0 %v2740
    %2768 = vmatpush.bf16.msra.mxu0 %v2739
    %2769 = vmatpush.bf16.msra.mxu0 %v2738
    %2770 = vmatpush.bf16.msra.mxu0 %v2737
    %2771 = vmatpush.bf16.msra.mxu0 %v2736
    %2772 = vmatpush.bf16.msra.mxu0 %v2735
    %2773 = vmatpush.bf16.msra.mxu0 %v2734
    %2774 = vmatmul.bf16.gmra.mxu0 %v2610
    %v2775 = vpop.f32.mrf.mxu0
    %v2776 = vadd.f32 %v2667, %v2775
    %v2777 = vpop.f32.mrf.mxu0
    %2778 = vdwg.mxu0
    %2779 = vmatpush.bf16.msra.mxu0 %v2749
    %2780 = vmatpush.bf16.msra.mxu0 %v2748
    %2781 = vmatpush.bf16.msra.mxu0 %v2747
    %2782 = vmatpush.bf16.msra.mxu0 %v2746
    %2783 = vmatpush.bf16.msra.mxu0 %v2745
    %2784 = vmatpush.bf16.msra.mxu0 %v2744
    %2785 = vmatpush.bf16.msra.mxu0 %v2743
    %2786 = vmatpush.bf16.msra.mxu0 %v2742
    %2787 = vmatmul.bf16.gmra.mxu0 %v2611
    %v2788 = vpop.f32.mrf.mxu0
    %v2789 = vadd.f32 %v2776, %v2788
    %v2790 = vpop.f32.mrf.mxu0
    %2791 = vdwg.mxu0
    %v2793 = vperm.slane %v2646, 0
    %v2795 = vadd.f32 %v2789, %v2793
    %v2796 = vmax.f32 %v2795, 0.0
    %v2797 = vpack.c.bf16 %v2796, %v2796
    %v2798 = vld [vmem:[#allocation7] sm:$0xf]
    %v2799 = vld [vmem:[#allocation7 + $0x4] sm:$0xf]
    %v2800 = vld [vmem:[#allocation7 + $0x8] sm:$0xf]
    %v2801 = vld [vmem:[#allocation7 + $0xc] sm:$0xf]
    %v2802 = vld [vmem:[#allocation7 + $0x10] sm:$0xf]
    %v2803 = vld [vmem:[#allocation7 + $0x14] sm:$0xf]
    %v2804 = vld [vmem:[#allocation7 + $0x18] sm:$0xf]
    %v2805 = vld [vmem:[#allocation7 + $0x1c] sm:$0xf]
    %v2806 = vld [vmem:[#allocation7 + $0x20] sm:$0xf]
    %v2807 = vld [vmem:[#allocation7 + $0x24] sm:$0xf]
    %v2808 = vld [vmem:[#allocation7 + $0x28] sm:$0xf]
    %v2809 = vld [vmem:[#allocation7 + $0x2c] sm:$0xf]
    %v2810 = vld [vmem:[#allocation7 + $0x30] sm:$0xf]
    %v2811 = vld [vmem:[#allocation7 + $0x34] sm:$0xf]
    %v2812 = vld [vmem:[#allocation7 + $0x38] sm:$0xf]
    %v2813 = vld [vmem:[#allocation7 + $0x3c] sm:$0xf]
    %v2814 = vld [vmem:[#allocation7 + $0x40] sm:$0xf]
    %v2815 = vld [vmem:[#allocation7 + $0x44] sm:$0xf]
    %v2816 = vld [vmem:[#allocation7 + $0x48] sm:$0xf]
    %v2817 = vld [vmem:[#allocation7 + $0x4c] sm:$0xf]
    %v2818 = vld [vmem:[#allocation7 + $0x50] sm:$0xf]
    %v2819 = vld [vmem:[#allocation7 + $0x54] sm:$0xf]
    %v2820 = vld [vmem:[#allocation7 + $0x58] sm:$0xf]
    %v2821 = vld [vmem:[#allocation7 + $0x5c] sm:$0xf]
    %v2822 = vld [vmem:[#allocation7 + $0x60] sm:$0xf]
    %v2823 = vld [vmem:[#allocation7 + $0x64] sm:$0xf]
    %v2824 = vld [vmem:[#allocation7 + $0x68] sm:$0xf]
    %v2825 = vld [vmem:[#allocation7 + $0x6c] sm:$0xf]
    %v2826 = vld [vmem:[#allocation7 + $0x70] sm:$0xf]
    %v2827 = vld [vmem:[#allocation7 + $0x74] sm:$0xf]
    %v2828 = vld [vmem:[#allocation7 + $0x78] sm:$0xf]
    %v2829 = vld [vmem:[#allocation7 + $0x7c] sm:$0xf]
    %v2830 = vld [vmem:[%s10] sm:$0x1]
    %v2832 = vperm.slane %v2830, 0
    %v2866 = vunpack.c.l.b16 %v2798
    %v2867 = vunpack.c.l.b16 %v2799
    %v2868 = vunpack.c.l.b16 %v2800
    %v2869 = vunpack.c.l.b16 %v2801
    %v2870 = vunpack.c.l.b16 %v2802
    %v2871 = vunpack.c.l.b16 %v2803
    %v2872 = vunpack.c.l.b16 %v2804
    %v2873 = vunpack.c.l.b16 %v2805
    %v2874 = vunpack.c.l.b16 %v2806
    %v2875 = vunpack.c.l.b16 %v2807
    %v2876 = vunpack.c.l.b16 %v2808
    %v2877 = vunpack.c.l.b16 %v2809
    %v2878 = vunpack.c.l.b16 %v2810
    %v2879 = vunpack.c.l.b16 %v2811
    %v2880 = vunpack.c.l.b16 %v2812
    %v2881 = vunpack.c.l.b16 %v2813
    %v2882 = vunpack.c.l.b16 %v2814
    %v2883 = vunpack.c.l.b16 %v2815
    %v2884 = vunpack.c.l.b16 %v2816
    %v2885 = vunpack.c.l.b16 %v2817
    %v2886 = vunpack.c.l.b16 %v2818
    %v2887 = vunpack.c.l.b16 %v2819
    %v2888 = vunpack.c.l.b16 %v2820
    %v2889 = vunpack.c.l.b16 %v2821
    %v2890 = vunpack.c.l.b16 %v2822
    %v2891 = vunpack.c.l.b16 %v2823
    %v2892 = vunpack.c.l.b16 %v2824
    %v2893 = vunpack.c.l.b16 %v2825
    %v2894 = vunpack.c.l.b16 %v2826
    %v2895 = vunpack.c.l.b16 %v2827
    %v2896 = vunpack.c.l.b16 %v2828
    %v2897 = vunpack.c.l.b16 %v2829
    %v2898 = vpack.c.b16 %v2867, %v2866
    %v2899 = vpack.c.b16 %v2869, %v2868
    %v2900 = vpack.c.b16 %v2871, %v2870
    %v2901 = vpack.c.b16 %v2873, %v2872
    %v2902 = vpack.c.b16 %v2875, %v2874
    %v2903 = vpack.c.b16 %v2877, %v2876
    %v2904 = vpack.c.b16 %v2879, %v2878
    %v2905 = vpack.c.b16 %v2881, %v2880
    %v2906 = vpack.c.b16 %v2883, %v2882
    %v2907 = vpack.c.b16 %v2885, %v2884
    %v2908 = vpack.c.b16 %v2887, %v2886
    %v2909 = vpack.c.b16 %v2889, %v2888
    %v2910 = vpack.c.b16 %v2891, %v2890
    %v2911 = vpack.c.b16 %v2893, %v2892
    %v2912 = vpack.c.b16 %v2895, %v2894
    %v2913 = vpack.c.b16 %v2897, %v2896
    %2930 = vmatpush.bf16.msra.mxu0 %v2905
    %2931 = vmatpush.bf16.msra.mxu0 %v2904
    %2932 = vmatpush.bf16.msra.mxu0 %v2903
    %2933 = vmatpush.bf16.msra.mxu0 %v2902
    %2934 = vmatpush.bf16.msra.mxu0 %v2901
    %2935 = vmatpush.bf16.msra.mxu0 %v2900
    %2936 = vmatpush.bf16.msra.mxu0 %v2899
    %2937 = vmatpush.bf16.msra.mxu0 %v2898
    %2938 = vmatmul.bf16.gmra.mxu0 %v2610
    %v2939 = vpop.f32.mrf.mxu0
    %v2940 = vadd.f32 %v2832, %v2939
    %v2941 = vpop.f32.mrf.mxu0
    %2942 = vdwg.mxu0
    %2943 = vmatpush.bf16.msra.mxu0 %v2913
    %2944 = vmatpush.bf16.msra.mxu0 %v2912
    %2945 = vmatpush.bf16.msra.mxu0 %v2911
    %2946 = vmatpush.bf16.msra.mxu0 %v2910
    %2947 = vmatpush.bf16.msra.mxu0 %v2909
    %2948 = vmatpush.bf16.msra.mxu0 %v2908
    %2949 = vmatpush.bf16.msra.mxu0 %v2907
    %2950 = vmatpush.bf16.msra.mxu0 %v2906
    %2951 = vmatmul.bf16.gmra.mxu0 %v2611
    %v2952 = vpop.f32.mrf.mxu0
    %v2953 = vadd.f32 %v2940, %v2952
    %v2954 = vpop.f32.mrf.mxu0
    %2955 = vdwg.mxu0
    %v2956 = vmax.f32 %v2953, 0.0
    %v2957 = vpack.c.bf16 %v2956, %v2956
    %v2958 = vld [vmem:[%s11] sm:$0xf]
    %v2959 = vld [vmem:[%s11 + $0x4] sm:$0xf]
    %v2960 = vld [vmem:[%s11 + $0x8] sm:$0xf]
    %v2961 = vld [vmem:[%s11 + $0xc] sm:$0xf]
    %v2962 = vld [vmem:[%s11 + $0x10] sm:$0xf]
    %v2963 = vld [vmem:[%s11 + $0x14] sm:$0xf]
    %v2964 = vld [vmem:[%s11 + $0x18] sm:$0xf]
    %v2965 = vld [vmem:[%s11 + $0x1c] sm:$0xf]
    %v2966 = vld [vmem:[%s11 + $0x20] sm:$0xf]
    %v2967 = vld [vmem:[%s11 + $0x24] sm:$0xf]
    %v2968 = vld [vmem:[%s11 + $0x28] sm:$0xf]
    %v2969 = vld [vmem:[%s11 + $0x2c] sm:$0xf]
    %v2970 = vld [vmem:[%s11 + $0x30] sm:$0xf]
    %v2971 = vld [vmem:[%s11 + $0x34] sm:$0xf]
    %v2972 = vld [vmem:[%s11 + $0x38] sm:$0xf]
    %v2973 = vld [vmem:[%s11 + $0x3c] sm:$0xf]
    %v2974 = vld [vmem:[#allocation9] sm:$0xf]
    %v2975 = vld [vmem:[#allocation9 + $0x4] sm:$0xf]
    %v2976 = vld [vmem:[#allocation9 + $0x8] sm:$0xf]
    %v2977 = vld [vmem:[#allocation9 + $0xc] sm:$0xf]
    %v2978 = vld [vmem:[#allocation9 + $0x10] sm:$0xf]
    %v2979 = vld [vmem:[#allocation9 + $0x14] sm:$0xf]
    %v2980 = vld [vmem:[#allocation9 + $0x18] sm:$0xf]
    %v2981 = vld [vmem:[#allocation9 + $0x1c] sm:$0xf]
    %v2982 = vld [vmem:[#allocation9 + $0x20] sm:$0xf]
    %v2983 = vld [vmem:[#allocation9 + $0x24] sm:$0xf]
    %v2984 = vld [vmem:[#allocation9 + $0x28] sm:$0xf]
    %v2985 = vld [vmem:[#allocation9 + $0x2c] sm:$0xf]
    %v2986 = vld [vmem:[#allocation9 + $0x30] sm:$0xf]
    %v2987 = vld [vmem:[#allocation9 + $0x34] sm:$0xf]
    %v2988 = vld [vmem:[#allocation9 + $0x38] sm:$0xf]
    %v2989 = vld [vmem:[#allocation9 + $0x3c] sm:$0xf]
    %v2990 = vld [vmem:[%s13] sm:$0x1]
    %v3007 = vunpack.c.l.b16 %v2974
    %v3008 = vunpack.c.l.b16 %v2975
    %v3009 = vunpack.c.l.b16 %v2976
    %v3010 = vunpack.c.l.b16 %v2977
    %v3011 = vunpack.c.l.b16 %v2978
    %v3012 = vunpack.c.l.b16 %v2979
    %v3013 = vunpack.c.l.b16 %v2980
    %v3014 = vunpack.c.l.b16 %v2981
    %v3015 = vunpack.c.l.b16 %v2982
    %v3016 = vunpack.c.l.b16 %v2983
    %v3017 = vunpack.c.l.b16 %v2984
    %v3018 = vunpack.c.l.b16 %v2985
    %v3019 = vunpack.c.l.b16 %v2986
    %v3020 = vunpack.c.l.b16 %v2987
    %v3021 = vunpack.c.l.b16 %v2988
    %v3022 = vunpack.c.l.b16 %v2989
    %v3023 = vpack.c.b16 %v3008, %v3007
    %v3024 = vpack.c.b16 %v3010, %v3009
    %v3025 = vpack.c.b16 %v3012, %v3011
    %v3026 = vpack.c.b16 %v3014, %v3013
    %v3027 = vpack.c.b16 %v3016, %v3015
    %v3028 = vpack.c.b16 %v3018, %v3017
    %v3029 = vpack.c.b16 %v3020, %v3019
    %v3030 = vpack.c.b16 %v3022, %v3021
    %3039 = vmatpush.bf16.msra.mxu0 %v3030
    %3040 = vmatpush.bf16.msra.mxu0 %v3029
    %3041 = vmatpush.bf16.msra.mxu0 %v3028
    %3042 = vmatpush.bf16.msra.mxu0 %v3027
    %3043 = vmatpush.bf16.msra.mxu0 %v3026
    %3044 = vmatpush.bf16.msra.mxu0 %v3025
    %3045 = vmatpush.bf16.msra.mxu0 %v3024
    %3046 = vmatpush.bf16.msra.mxu0 %v3023
    %3047 = vmatmul.bf16.gmra.mxu0 %v2957
    %v3048 = vpop.f32.mrf.mxu0
    %v3049 = vadd.f32 0.0, %v3048
    %v3050 = vpop.f32.mrf.mxu0
    %3051 = vdwg.mxu0
    %v3068 = vunpack.c.l.b16 %v2958
    %v3069 = vunpack.c.l.b16 %v2959
    %v3070 = vunpack.c.l.b16 %v2960
    %v3071 = vunpack.c.l.b16 %v2961
    %v3072 = vunpack.c.l.b16 %v2962
    %v3073 = vunpack.c.l.b16 %v2963
    %v3074 = vunpack.c.l.b16 %v2964
    %v3075 = vunpack.c.l.b16 %v2965
    %v3076 = vunpack.c.l.b16 %v2966
    %v3077 = vunpack.c.l.b16 %v2967
    %v3078 = vunpack.c.l.b16 %v2968
    %v3079 = vunpack.c.l.b16 %v2969
    %v3080 = vunpack.c.l.b16 %v2970
    %v3081 = vunpack.c.l.b16 %v2971
    %v3082 = vunpack.c.l.b16 %v2972
    %v3083 = vunpack.c.l.b16 %v2973
    %v3084 = vpack.c.b16 %v3069, %v3068
    %v3085 = vpack.c.b16 %v3071, %v3070
    %v3086 = vpack.c.b16 %v3073, %v3072
    %v3087 = vpack.c.b16 %v3075, %v3074
    %v3088 = vpack.c.b16 %v3077, %v3076
    %v3089 = vpack.c.b16 %v3079, %v3078
    %v3090 = vpack.c.b16 %v3081, %v3080
    %v3091 = vpack.c.b16 %v3083, %v3082
    %3100 = vmatpush.bf16.msra.mxu0 %v3091
    %3101 = vmatpush.bf16.msra.mxu0 %v3090
    %3102 = vmatpush.bf16.msra.mxu0 %v3089
    %3103 = vmatpush.bf16.msra.mxu0 %v3088
    %3104 = vmatpush.bf16.msra.mxu0 %v3087
    %3105 = vmatpush.bf16.msra.mxu0 %v3086
    %3106 = vmatpush.bf16.msra.mxu0 %v3085
    %3107 = vmatpush.bf16.msra.mxu0 %v3084
    %3108 = vmatmul.bf16.gmra.mxu0 %v2797
    %v3109 = vpop.f32.mrf.mxu0
    %v3110 = vadd.f32 %v3049, %v3109
    %v3111 = vpop.f32.mrf.mxu0
    %3112 = vdwg.mxu0
    %v3114 = vperm.slane %v2990, 0
    %v3116 = vadd.f32 %v3110, %v3114
    %v3117 = vlaneseq
    %v3118 = vand.u32 %v3117, 127
    %v3119 = vmax.f32 %v3116, -20.0
    %v3120 = vmin.f32 %v3119, 2.0
    %v3121 = vmul.f32 %v3120, 1.442695
    %v3122 = vpow.pop %v3121
    %vm3123 = vcmp.lt.s32.totalorder %v3118, 4
    %vm3124 = vcmp.lt.s32.totalorder %v3118, 8
    %vm3125 = vcmp.lt.s32.totalorder %v3118, 12
    %v3126 = vtanh.pop %v3116
    %vm3127 = vcmp.lt.s32.totalorder %v3118, 13
    %v3128 = vxor.u32 %v3116, 2147483648
    %v3129 = vmul.f32 %v3128, 1.442695
    %v3130 = vpow.pop %v3129
    %v3131 = vadd.f32 %v3130, 1.0
    %v3132 = vrcp.pop %v3131
    %v3133 = vmul.f32 %v3131, %v3132
    %v3134 = vsub.f32 1.0, %v3133
    %v3135 = vmul.f32 %v3132, %v3134
    %v3136 = vadd.f32 %v3132, %v3135
    %vm3137 = vweird.f32 %v3131
    %vm3138 = vweird.f32 %v3132
    %vm3139 = vmor %vm3137, %vm3138
    %v3140 = vsel %vm3139, %v3132, %v3136
    %v3141 = vand.u32 2147483647, %v3131
    %vm3142 = vcmp.eq.f32.partialorder %v3141, 8.507059e+37
    %v3143 = vand.u32 %v3131, 2147483648
    %v3144 = vor.u32 1.1754944e-38, %v3143
    %v3145 = vsel %vm3142, %v3144, %v3140
    %v3146 = vmul.f32 1.0, %v3145
    %v3147 = vsel %vm3127, %v3146, 0.0
    %v3148 = vsel %vm3125, %v3126, %v3147
    %v3149 = vsel %vm3124, %v3122, %v3148
    %v3150 = vsel %vm3123, %v3116, %v3149
    %3151 = vst [vmem:[%s14] sm:$0xff] %v3150
    // Predicated region
    $region78: #{script_policy_forward.1} parent=1 // pred_check
      _
    $region79: #{script_policy_forward.1} parent=1 // pred_check_branch
      %3153 = sbr.rel (0) target = $region81
    $region80: #{script_policy_forward.1} parent=1 // pred_region
      _
    $region81: #{script_policy_forward.1} parent=1 // pred_fallthru
      _
    // Predicated region
    $region82: #{script_policy_forward.1} parent=1 // pred_check
      _
    $region83: #{script_policy_forward.1} parent=1 // pred_check_branch
      %3155 = sbr.rel (0) target = $region85
    $region84: #{script_policy_forward.1} parent=1 // pred_region
      _
    $region85: #{script_policy_forward.1} parent=1 // pred_fallthru
      _
    %3156 = vsyncpa [#allocation3], 1
    %3157 = vsyncpa [#allocation5], 1
    %3158 = vsyncpa [#allocation8], 1

</llo_original>
